<compile_context>
chip_gen: v7x
topology: tpu7x:2x2x1
jax: 0.10.0
libtpu: 0.0.40
codegen_flags: <defaults>
</compile_context>

<pallas_src>
import functools

import jax
import jax.numpy as jnp
from jax.experimental import pallas as pl
from jax.experimental.pallas import tpu as pltpu


def vae_kernel(x_ref, eps_ref,
               w1_ref, b1_ref, w23_ref, b23_ref,
               w4_ref, b4_ref, w5_ref, b5_ref,
               xrec_ref, mu_ref, logvar_ref, *, z_dim):
    """One batch-tile of the VAE forward pass, entirely in VMEM.

    Matmul operands are bf16 (weights arrive pre-cast, activations are cast
    just before each dot); accumulation and all elementwise math are f32.
    """
    x16 = x_ref[...].astype(jnp.bfloat16)
    eps = eps_ref[...]                                           # f32

    # ---- encode ----
    h = jnp.dot(x16, w1_ref[...], preferred_element_type=jnp.float32) + b1_ref[...]
    h = jnp.maximum(h, 0.0)                                      # relu (f32)

    # fused mu/logvar head: single [h_dim, 2*z_dim] matmul
    head = (jnp.dot(h.astype(jnp.bfloat16), w23_ref[...],
                    preferred_element_type=jnp.float32) + b23_ref[...])
    mu = head[:, :z_dim]
    logvar = head[:, z_dim:]

    # ---- reparameterize (f32, EUP exp) ----
    std = jnp.exp(logvar * 0.5)
    z = mu + eps * std

    # ---- decode ----
    h2 = (jnp.dot(z.astype(jnp.bfloat16), w4_ref[...],
                  preferred_element_type=jnp.float32) + b4_ref[...])
    h2 = jnp.maximum(h2, 0.0)                                    # relu (f32)
    logits = (jnp.dot(h2.astype(jnp.bfloat16), w5_ref[...],
                      preferred_element_type=jnp.float32) + b5_ref[...])

    xrec_ref[...] = jax.nn.sigmoid(logits)
    mu_ref[...] = mu
    logvar_ref[...] = logvar


def vae_forward(x, eps, params, *, batch_tile=128):
    """VAE forward via a Pallas kernel tiled over the batch axis.

    Weights are stored [in_features, out_features] (transpose of nn.Linear)
    so the kernel computes y = x @ W + b directly on the MXU. Biases are
    [1, out_features]. mu/logvar weights are fused wrapper-side.
    """
    (w1, b1, w2, b2, w3, b3, w4, b4, w5, b5) = params
    B, image_size = x.shape
    z_dim = w2.shape[1]

    batch_tile = min(batch_tile, B)
    assert B % batch_tile == 0
    assert batch_tile % 8 == 0 or batch_tile == B

    # Fuse the mu / logvar projections into one N = 2*z_dim matmul.
    w23 = jnp.concatenate([w2, w3], axis=1)        # [h_dim, 2*z_dim]
    b23 = jnp.concatenate([b2, b3], axis=1)        # [1,     2*z_dim]

    # bf16 weight operands: MXU-native on v6e/v7x and half the weight DMA bytes.
    w1b = w1.astype(jnp.bfloat16)
    w23b = w23.astype(jnp.bfloat16)
    w4b = w4.astype(jnp.bfloat16)
    w5b = w5.astype(jnp.bfloat16)

    grid = (B // batch_tile,)

    def row_spec(d):
        # batch-tiled activation: block (batch_tile, d), indexed by batch tile i
        return pl.BlockSpec((batch_tile, d), lambda i: (i, 0))

    def full_spec(shape):
        # whole parameter resident every grid step
        # TODO(synk): pipeline_mode=pl.Buffered(1) would drop the redundant
        # double-buffer for these grid-invariant weights; irrelevant at ~0.5 MiB.
        return pl.BlockSpec(shape, lambda i: (0,) * len(shape))

    out_shapes = (
        jax.ShapeDtypeStruct((B, image_size), jnp.float32),   # x_reconst
        jax.ShapeDtypeStruct((B, z_dim), jnp.float32),        # mu
        jax.ShapeDtypeStruct((B, z_dim), jnp.float32),        # log_var
    )

    kernel = functools.partial(vae_kernel, z_dim=z_dim)

    return pl.pallas_call(
        kernel,
        out_shape=out_shapes,
        grid=grid,
        in_specs=[
            row_spec(image_size),                 # x
            row_spec(z_dim),                      # eps
            full_spec(w1b.shape), full_spec(b1.shape),
            full_spec(w23b.shape), full_spec(b23.shape),
            full_spec(w4b.shape), full_spec(b4.shape),
            full_spec(w5b.shape), full_spec(b5.shape),
        ],
        out_specs=(
            row_spec(image_size),                 # x_reconst
            row_spec(z_dim),                      # mu
            row_spec(z_dim),                      # log_var
        ),
        compiler_params=pltpu.CompilerParams(
            dimension_semantics=("parallel",),    # batch tiles -> both v7x TCs
        ),
    )(x, eps, w1b, b1, w23b, b23, w4b, b4, w5b, b5)


def init_linear(key, fan_in, fan_out):
    """PyTorch nn.Linear-style init: U(-1/sqrt(fan_in), 1/sqrt(fan_in)).
    Weight returned as [in, out] (transposed relative to PyTorch)."""
    kw, kb = jax.random.split(key)
    bound = 1.0 / jnp.sqrt(jnp.float32(fan_in))
    w = jax.random.uniform(kw, (fan_in, fan_out), jnp.float32, -bound, bound)
    b = jax.random.uniform(kb, (1, fan_out), jnp.float32, -bound, bound)
    return w, b


def vae_reference(x, eps, params):
    """Pure-JAX f32 reference for correctness checking (module semantics)."""
    (w1, b1, w2, b2, w3, b3, w4, b4, w5, b5) = params
    h = jax.nn.relu(x @ w1 + b1)
    mu = h @ w2 + b2
    logvar = h @ w3 + b3
    z = mu + eps * jnp.exp(logvar / 2)
    h2 = jax.nn.relu(z @ w4 + b4)
    xrec = jax.nn.sigmoid(h2 @ w5 + b5)
    return xrec, mu, logvar


if __name__ == "__main__":
    # MXU-friendly shapes consistent with the module's MLP structure.
    B = 256
    image_size = 256
    h_dim = 256
    z_dim = 128   # fused head width = 2*z_dim = 256 (fills 256-wide MXU)

    root = jax.random.PRNGKey(0)
    kx, keps, k1, k2, k3, k4, k5 = jax.random.split(root, 7)

    x = jax.random.uniform(kx, (B, image_size), jnp.float32)   # "image" input
    eps = jax.random.normal(keps, (B, z_dim), jnp.float32)     # reparam noise
    # TODO(synk): torch.randn_like is sampled outside the kernel (passed as eps)
    # so the kernel stays deterministic; pltpu.prng_* could generate it in-kernel.

    w1, b1 = init_linear(k1, image_size, h_dim)
    w2, b2 = init_linear(k2, h_dim, z_dim)
    w3, b3 = init_linear(k3, h_dim, z_dim)
    w4, b4 = init_linear(k4, z_dim, h_dim)
    w5, b5 = init_linear(k5, h_dim, image_size)
    params = (w1, b1, w2, b2, w3, b3, w4, b4, w5, b5)

    run = jax.jit(functools.partial(vae_forward, batch_tile=128))
    x_rec, mu, logvar = run(x, eps, params)
    jax.block_until_ready((x_rec, mu, logvar))

    # Verify against pure-f32 reference (bf16 matmul operands => looser tol).
    x_rec_r, mu_r, logvar_r = vae_reference(x, eps, params)
    assert x_rec.shape == (B, image_size) and mu.shape == (B, z_dim)
    assert jnp.allclose(x_rec, x_rec_r, atol=2e-2, rtol=2e-2)
    assert jnp.allclose(mu, mu_r, atol=2e-2, rtol=2e-2)
    assert jnp.allclose(logvar, logvar_r, atol=2e-2, rtol=2e-2)

    print("KERNEL_OK")
</pallas_src>

<mosaic_0001>
module attributes {stable_mosaic.version = 11 : i64} {
  func.func @vae_kernel(%arg0: i32, %arg1: memref<128x256xf32, #tpu.memory_space<vmem>>, %arg2: memref<128x128xf32, #tpu.memory_space<vmem>>, %arg3: memref<256x256xbf16, #tpu.memory_space<vmem>>, %arg4: memref<1x256xf32, #tpu.memory_space<vmem>>, %arg5: memref<256x256xbf16, #tpu.memory_space<vmem>>, %arg6: memref<1x256xf32, #tpu.memory_space<vmem>>, %arg7: memref<128x256xbf16, #tpu.memory_space<vmem>>, %arg8: memref<1x256xf32, #tpu.memory_space<vmem>>, %arg9: memref<256x256xbf16, #tpu.memory_space<vmem>>, %arg10: memref<1x256xf32, #tpu.memory_space<vmem>>, %arg11: memref<128x256xf32, #tpu.memory_space<vmem>>, %arg12: memref<128x128xf32, #tpu.memory_space<vmem>>, %arg13: memref<128x128xf32, #tpu.memory_space<vmem>>) attributes {dimension_semantics = [#tpu.dimension_semantics<parallel>], iteration_bounds = array<i64: 2>, scalar_prefetch = 0 : i64, scratch_operands = 0 : i64, tpu.core_type = #tpu.core_type<tc>, window_params = [{transform_indices = @transform_0, window_bounds = array<i64: 128, 256>}, {transform_indices = @transform_1, window_bounds = array<i64: 128, 128>}, {pipeline_mode = #tpu.pipeline_mode<synchronous>, transform_indices = @transform_2, window_bounds = array<i64: 256, 256>}, {pipeline_mode = #tpu.pipeline_mode<synchronous>, transform_indices = @transform_3, window_bounds = array<i64: 1, 256>}, {pipeline_mode = #tpu.pipeline_mode<synchronous>, transform_indices = @transform_4, window_bounds = array<i64: 256, 256>}, {pipeline_mode = #tpu.pipeline_mode<synchronous>, transform_indices = @transform_5, window_bounds = array<i64: 1, 256>}, {pipeline_mode = #tpu.pipeline_mode<synchronous>, transform_indices = @transform_6, window_bounds = array<i64: 128, 256>}, {pipeline_mode = #tpu.pipeline_mode<synchronous>, transform_indices = @transform_7, window_bounds = array<i64: 1, 256>}, {pipeline_mode = #tpu.pipeline_mode<synchronous>, transform_indices = @transform_8, window_bounds = array<i64: 256, 256>}, {pipeline_mode = #tpu.pipeline_mode<synchronous>, transform_indices = @transform_9, window_bounds = array<i64: 1, 256>}, {transform_indices = @transform_10, window_bounds = array<i64: 128, 256>}, {transform_indices = @transform_11, window_bounds = array<i64: 128, 128>}, {transform_indices = @transform_12, window_bounds = array<i64: 128, 128>}]} {
    %c0 = arith.constant 0 : index
    %c0_0 = arith.constant 0 : index
    %0 = vector.load %arg1[%c0, %c0_0] : memref<128x256xf32, #tpu.memory_space<vmem>>, vector<128x256xf32>
    %1 = arith.truncf %0 : vector<128x256xf32> to vector<128x256xbf16>
    %c0_1 = arith.constant 0 : index
    %c0_2 = arith.constant 0 : index
    %2 = vector.load %arg2[%c0_1, %c0_2] : memref<128x128xf32, #tpu.memory_space<vmem>>, vector<128x128xf32>
    %c0_3 = arith.constant 0 : index
    %c0_4 = arith.constant 0 : index
    %3 = vector.load %arg3[%c0_3, %c0_4] : memref<256x256xbf16, #tpu.memory_space<vmem>>, vector<256x256xbf16>
    %cst = arith.constant dense<0.000000e+00> : vector<128x256xf32>
    %4 = tpu.matmul %1, %3, %cst {dimension_numbers = #tpu.dot_dimension_numbers<[1], [0], [0], [1], [0, 0, 1, 1], [], []>} : vector<128x256xbf16>, vector<256x256xbf16>, vector<128x256xf32> -> vector<128x256xf32>
    %c0_5 = arith.constant 0 : index
    %c0_6 = arith.constant 0 : index
    %5 = vector.load %arg4[%c0_5, %c0_6] : memref<1x256xf32, #tpu.memory_space<vmem>>, vector<1x256xf32>
    %6 = vector.broadcast %5 : vector<1x256xf32> to vector<128x256xf32>
    %7 = arith.addf %4, %6 : vector<128x256xf32>
    %cst_7 = arith.constant 0.000000e+00 : f32
    %8 = vector.broadcast %cst_7 : f32 to vector<128x256xf32>
    %9 = arith.maximumf %7, %8 : vector<128x256xf32>
    %10 = arith.truncf %9 : vector<128x256xf32> to vector<128x256xbf16>
    %c0_8 = arith.constant 0 : index
    %c0_9 = arith.constant 0 : index
    %11 = vector.load %arg5[%c0_8, %c0_9] : memref<256x256xbf16, #tpu.memory_space<vmem>>, vector<256x256xbf16>
    %cst_10 = arith.constant dense<0.000000e+00> : vector<128x256xf32>
    %12 = tpu.matmul %10, %11, %cst_10 {dimension_numbers = #tpu.dot_dimension_numbers<[1], [0], [0], [1], [0, 0, 1, 1], [], []>} : vector<128x256xbf16>, vector<256x256xbf16>, vector<128x256xf32> -> vector<128x256xf32>
    %c0_11 = arith.constant 0 : index
    %c0_12 = arith.constant 0 : index
    %13 = vector.load %arg6[%c0_11, %c0_12] : memref<1x256xf32, #tpu.memory_space<vmem>>, vector<1x256xf32>
    %14 = vector.broadcast %13 : vector<1x256xf32> to vector<128x256xf32>
    %15 = arith.addf %12, %14 : vector<128x256xf32>
    %16 = vector.extract_strided_slice %15 {offsets = [0, 0], sizes = [128, 128], strides = [1, 1]} : vector<128x256xf32> to vector<128x128xf32>
    %17 = vector.extract_strided_slice %15 {offsets = [0, 128], sizes = [128, 128], strides = [1, 1]} : vector<128x256xf32> to vector<128x128xf32>
    %cst_13 = arith.constant 5.000000e-01 : f32
    %18 = vector.broadcast %cst_13 : f32 to vector<128x128xf32>
    %19 = arith.mulf %17, %18 : vector<128x128xf32>
    %20 = math.exp %19 : vector<128x128xf32>
    %21 = arith.mulf %2, %20 : vector<128x128xf32>
    %22 = arith.addf %16, %21 : vector<128x128xf32>
    %23 = arith.truncf %22 : vector<128x128xf32> to vector<128x128xbf16>
    %c0_14 = arith.constant 0 : index
    %c0_15 = arith.constant 0 : index
    %24 = vector.load %arg7[%c0_14, %c0_15] : memref<128x256xbf16, #tpu.memory_space<vmem>>, vector<128x256xbf16>
    %cst_16 = arith.constant dense<0.000000e+00> : vector<128x256xf32>
    %25 = tpu.matmul %23, %24, %cst_16 {dimension_numbers = #tpu.dot_dimension_numbers<[1], [0], [0], [1], [0, 0, 1, 1], [], []>} : vector<128x128xbf16>, vector<128x256xbf16>, vector<128x256xf32> -> vector<128x256xf32>
    %c0_17 = arith.constant 0 : index
    %c0_18 = arith.constant 0 : index
    %26 = vector.load %arg8[%c0_17, %c0_18] : memref<1x256xf32, #tpu.memory_space<vmem>>, vector<1x256xf32>
    %27 = vector.broadcast %26 : vector<1x256xf32> to vector<128x256xf32>
    %28 = arith.addf %25, %27 : vector<128x256xf32>
    %cst_19 = arith.constant 0.000000e+00 : f32
    %29 = vector.broadcast %cst_19 : f32 to vector<128x256xf32>
    %30 = arith.maximumf %28, %29 : vector<128x256xf32>
    %31 = arith.truncf %30 : vector<128x256xf32> to vector<128x256xbf16>
    %c0_20 = arith.constant 0 : index
    %c0_21 = arith.constant 0 : index
    %32 = vector.load %arg9[%c0_20, %c0_21] : memref<256x256xbf16, #tpu.memory_space<vmem>>, vector<256x256xbf16>
    %cst_22 = arith.constant dense<0.000000e+00> : vector<128x256xf32>
    %33 = tpu.matmul %31, %32, %cst_22 {dimension_numbers = #tpu.dot_dimension_numbers<[1], [0], [0], [1], [0, 0, 1, 1], [], []>} : vector<128x256xbf16>, vector<256x256xbf16>, vector<128x256xf32> -> vector<128x256xf32>
    %c0_23 = arith.constant 0 : index
    %c0_24 = arith.constant 0 : index
    %34 = vector.load %arg10[%c0_23, %c0_24] : memref<1x256xf32, #tpu.memory_space<vmem>>, vector<1x256xf32>
    %35 = vector.broadcast %34 : vector<1x256xf32> to vector<128x256xf32>
    %36 = arith.addf %33, %35 : vector<128x256xf32>
    %37 = arith.negf %36 : vector<128x256xf32>
    %38 = math.exp %37 : vector<128x256xf32>
    %cst_25 = arith.constant 1.000000e+00 : f32
    %39 = vector.broadcast %cst_25 : f32 to vector<128x256xf32>
    %40 = arith.addf %39, %38 : vector<128x256xf32>
    %41 = arith.divf %39, %40 : vector<128x256xf32>
    %c0_26 = arith.constant 0 : index
    %c0_27 = arith.constant 0 : index
    %42 = vector.load %arg11[%c0_26, %c0_27] : memref<128x256xf32, #tpu.memory_space<vmem>>, vector<128x256xf32>
    tpu.vector_store %arg11[%c0_26, %c0_27], %41 {strides = array<i32>} : memref<128x256xf32, #tpu.memory_space<vmem>>, vector<128x256xf32>,
    %c0_28 = arith.constant 0 : index
    %c0_29 = arith.constant 0 : index
    %43 = vector.load %arg12[%c0_28, %c0_29] : memref<128x128xf32, #tpu.memory_space<vmem>>, vector<128x128xf32>
    tpu.vector_store %arg12[%c0_28, %c0_29], %16 {strides = array<i32>} : memref<128x128xf32, #tpu.memory_space<vmem>>, vector<128x128xf32>,
    %c0_30 = arith.constant 0 : index
    %c0_31 = arith.constant 0 : index
    %44 = vector.load %arg13[%c0_30, %c0_31] : memref<128x128xf32, #tpu.memory_space<vmem>>, vector<128x128xf32>
    tpu.vector_store %arg13[%c0_30, %c0_31], %17 {strides = array<i32>} : memref<128x128xf32, #tpu.memory_space<vmem>>, vector<128x128xf32>,
    return
  }
  func.func @transform_0(%arg0: i32) -> (i32, i32) {
    %c0_i32 = arith.constant 0 : i32
    %c0_i32_0 = arith.constant 0 : i32
    return %arg0, %c0_i32 : i32, i32
  }
  func.func @transform_1(%arg0: i32) -> (i32, i32) {
    %c0_i32 = arith.constant 0 : i32
    %c0_i32_0 = arith.constant 0 : i32
    return %arg0, %c0_i32 : i32, i32
  }
  func.func @transform_2(%arg0: i32) -> (i32, i32) {
    %c0_i32 = arith.constant 0 : i32
    %c0_i32_0 = arith.constant 0 : i32
    %c0_i32_1 = arith.constant 0 : i32
    return %c0_i32, %c0_i32_0 : i32, i32
  }
  func.func @transform_3(%arg0: i32) -> (i32, i32) {
    %c0_i32 = arith.constant 0 : i32
    %c0_i32_0 = arith.constant 0 : i32
    %c0_i32_1 = arith.constant 0 : i32
    return %c0_i32, %c0_i32_0 : i32, i32
  }
  func.func @transform_4(%arg0: i32) -> (i32, i32) {
    %c0_i32 = arith.constant 0 : i32
    %c0_i32_0 = arith.constant 0 : i32
    %c0_i32_1 = arith.constant 0 : i32
    return %c0_i32, %c0_i32_0 : i32, i32
  }
  func.func @transform_5(%arg0: i32) -> (i32, i32) {
    %c0_i32 = arith.constant 0 : i32
    %c0_i32_0 = arith.constant 0 : i32
    %c0_i32_1 = arith.constant 0 : i32
    return %c0_i32, %c0_i32_0 : i32, i32
  }
  func.func @transform_6(%arg0: i32) -> (i32, i32) {
    %c0_i32 = arith.constant 0 : i32
    %c0_i32_0 = arith.constant 0 : i32
    %c0_i32_1 = arith.constant 0 : i32
    return %c0_i32, %c0_i32_0 : i32, i32
  }
  func.func @transform_7(%arg0: i32) -> (i32, i32) {
    %c0_i32 = arith.constant 0 : i32
    %c0_i32_0 = arith.constant 0 : i32
    %c0_i32_1 = arith.constant 0 : i32
    return %c0_i32, %c0_i32_0 : i32, i32
  }
  func.func @transform_8(%arg0: i32) -> (i32, i32) {
    %c0_i32 = arith.constant 0 : i32
    %c0_i32_0 = arith.constant 0 : i32
    %c0_i32_1 = arith.constant 0 : i32
    return %c0_i32, %c0_i32_0 : i32, i32
  }
  func.func @transform_9(%arg0: i32) -> (i32, i32) {
    %c0_i32 = arith.constant 0 : i32
    %c0_i32_0 = arith.constant 0 : i32
    %c0_i32_1 = arith.constant 0 : i32
    return %c0_i32, %c0_i32_0 : i32, i32
  }
  func.func @transform_10(%arg0: i32) -> (i32, i32) {
    %c0_i32 = arith.constant 0 : i32
    %c0_i32_0 = arith.constant 0 : i32
    return %arg0, %c0_i32 : i32, i32
  }
  func.func @transform_11(%arg0: i32) -> (i32, i32) {
    %c0_i32 = arith.constant 0 : i32
    %c0_i32_0 = arith.constant 0 : i32
    return %arg0, %c0_i32 : i32, i32
  }
  func.func @transform_12(%arg0: i32) -> (i32, i32) {
    %c0_i32 = arith.constant 0 : i32
    %c0_i32_0 = arith.constant 0 : i32
    return %arg0, %c0_i32 : i32, i32
  }
}

</mosaic_0001>

<llo_original>
// kernel: vae_forward.1
$region0: #{vae_forward.1}
  #allocation0 [shape = 'u32[]', space=smem, size = 0x4, offset = 0x4, fixed_abs, tag = 'smem constant byte address 0x4 - core index']
  #allocation1 [shape = 'u32[144,128]{1,0:T(1,128)}', space=vmem, size = 0x12000, scoped, tag = 'internal scratch']
  %s0 = inlined_call_operand.vmem [shape: f32[256,256], index: 0, kind: input, shape index: {}]
  %s1 = inlined_call_operand.vmem [shape: f32[256,128], index: 1, kind: input, shape index: {}]
  %s2 = inlined_call_operand.vmem [shape: bf16[256,256], index: 2, kind: input, shape index: {}]
  %s3 = inlined_call_operand.vmem [shape: f32[1,256], index: 3, kind: input, shape index: {}]
  %s4 = inlined_call_operand.vmem [shape: bf16[256,256], index: 4, kind: input, shape index: {}]
  %s5 = inlined_call_operand.vmem [shape: f32[1,256], index: 5, kind: input, shape index: {}]
  %s6 = inlined_call_operand.vmem [shape: bf16[128,256], index: 6, kind: input, shape index: {}]
  %s7 = inlined_call_operand.vmem [shape: f32[1,256], index: 7, kind: input, shape index: {}]
  %s8 = inlined_call_operand.vmem [shape: bf16[256,256], index: 8, kind: input, shape index: {}]
  %s9 = inlined_call_operand.vmem [shape: f32[1,256], index: 9, kind: input, shape index: {}]
  %s10 = inlined_call_operand.hbm [shape: f32[256,256], index: 10, kind: output, shape index: {0}]
  %s11 = inlined_call_operand.hbm [shape: f32[256,128], index: 11, kind: output, shape index: {1}]
  %s12 = inlined_call_operand.hbm [shape: f32[256,128], index: 12, kind: output, shape index: {2}]
  %13 = xla_tuple %s10, %s11, %s12
  %s14 = sld [smem:[#allocation0]]
  $region89: #{vae_forward.1} parent=0
    _
  %s16 = ssub.s32 1, %s14
  %s17 = scalar_select 0, %s16, %s14
  $region1: #{vae_forward.1} parent=0
    #allocation2 [shape = 'u8[262144]{0}', space=vmem, size = 0x40000, scoped, tag = 'output window, operand 0']
    #allocation3 [shape = 's32[2]{0}', space=sflag, size = 0x8, scoped, tag = 'scoped memory for vae_forward.1']
    #allocation4 [shape = 'u8[131072]{0}', space=vmem, size = 0x20000, scoped, tag = 'output window, operand 1']
    #allocation5 [shape = 's32[2]{0}', space=sflag, size = 0x8, scoped, tag = 'scoped memory for vae_forward.1']
    #allocation6 [shape = 'u8[131072]{0}', space=vmem, size = 0x20000, scoped, tag = 'output window, operand 2']
    %18 = vsyncpa [#allocation3], 0
    %s19 = scalar_lea.sflag [#allocation3], 1
    %20 = vsyncpa %s19, 0
    %21 = vsyncpa [#allocation5], 0
    %s22 = scalar_lea.sflag [#allocation5], 1
    %23 = vsyncpa %s22, 0
    loop: start=0, step=1, limit=4
    $region2: #{vae_forward.1} parent=1 // loop_pre_header
      _
    $region3: #{vae_forward.1} parent=1 // loop_header
      %s25 = sphi 0, %s29
      %p26 = scmp.ge.s32.totalorder %s25, 4
      %s35 = sphi 0, %s37
      %s38 = sphi 0, %s35
      %s39 = sphi 0, %s38
      %s55 = sphi 0, %s39
      %s61 = sphi 0, %s63
      %s64 = sphi 0, %s61
      %s65 = sphi 0, %s64
      %s81 = sphi 0, %s65
      %s85 = sphi 0, %s85
      %s87 = sphi 0, %s85
      %s88 = sphi 0, %s87
      %s102 = sphi 0, %s88
      %s106 = sphi 0, %s106
      %s108 = sphi 0, %s106
      %s109 = sphi 0, %s108
      %s123 = sphi 0, %s109
      %s127 = sphi 0, %s127
      %s129 = sphi 0, %s127
      %s130 = sphi 0, %s129
      %s144 = sphi 0, %s130
      %s148 = sphi 0, %s148
      %s150 = sphi 0, %s148
      %s151 = sphi 0, %s150
      %s165 = sphi 0, %s151
      %s169 = sphi 0, %s169
      %s171 = sphi 0, %s169
      %s172 = sphi 0, %s171
      %s186 = sphi 0, %s172
      %s190 = sphi 0, %s190
      %s192 = sphi 0, %s190
      %s193 = sphi 0, %s192
      %s207 = sphi 0, %s193
      %s211 = sphi 0, %s211
      %s213 = sphi 0, %s211
      %s214 = sphi 0, %s213
      %s228 = sphi 0, %s214
      %s232 = sphi 0, %s232
      %s234 = sphi 0, %s232
      %s235 = sphi 0, %s234
      %s249 = sphi 0, %s235
      %s255 = sphi 0, %s257
      %s258 = sphi 0, %s255
      %s259 = sphi 0, %s258
      %s275 = sphi 0, %s259
      %s281 = sphi 0, %s283
      %s284 = sphi 0, %s281
      %s285 = sphi 0, %s284
      %s301 = sphi 0, %s285
      %s307 = sphi 0, %s309
      %s310 = sphi 0, %s307
      %s311 = sphi 0, %s310
      %s327 = sphi 0, %s311
    $region4: #{vae_forward.1} parent=1 // loop_header_branch
      %28 = sbr.rel (%p26) target = $region8
    $region5: #{vae_forward.1} parent=1 // loop_body
      %s30 = ssub.s32 %s25, 1
      %s31 = ssub.s32 %s25, 2
      %s32 = sadd.s32 %s25, 1
      %s33 = ssub.s32 %s25, %s32
      %p34 = scmp.eq.s32.totalorder %s33, 0
      %s36 = sadd.s32 %s35, 1
      %s37 = scalar_select %p34, %s35, %s36
      %p40 = pneg %p34
      %p41 = scmp.eq.s32.totalorder %s25, 1
      %p42 = por %p40, %p41
      %p43 = scmp.ne.s32.totalorder %s35, %s38
      %p44 = scmp.eq.s32.totalorder %s25, 0
      %p45 = por %p43, %p44
      %p46 = scmp.ne.s32.totalorder %s35, %s38
      %p47 = scmp.eq.s32.totalorder %s30, 1
      %p48 = por %p46, %p47
      %p49 = scmp.ne.s32.totalorder %s38, %s39
      %p50 = scmp.eq.s32.totalorder %s30, 0
      %p51 = por %p49, %p50
      %p52 = scmp.ne.s32.totalorder %s38, %s39
      %p53 = scmp.eq.s32.totalorder %s31, 1
      %p54 = por %p52, %p53
      %p56 = scmp.ne.s32.totalorder %s39, %s55
      %p57 = scmp.eq.s32.totalorder %s31, 0
      %p58 = por %p56, %p57
      %s59 = ssub.s32 %s25, %s32
      %p60 = scmp.eq.s32.totalorder %s59, 0
      %s62 = sadd.s32 %s61, 1
      %s63 = scalar_select %p60, %s61, %s62
      %p66 = pneg %p60
      %p67 = scmp.eq.s32.totalorder %s25, 1
      %p68 = por %p66, %p67
      %p69 = scmp.ne.s32.totalorder %s61, %s64
      %p70 = scmp.eq.s32.totalorder %s25, 0
      %p71 = por %p69, %p70
      %p72 = scmp.ne.s32.totalorder %s61, %s64
      %p73 = scmp.eq.s32.totalorder %s30, 1
      %p74 = por %p72, %p73
      %p75 = scmp.ne.s32.totalorder %s64, %s65
      %p76 = scmp.eq.s32.totalorder %s30, 0
      %p77 = por %p75, %p76
      %p78 = scmp.ne.s32.totalorder %s64, %s65
      %p79 = scmp.eq.s32.totalorder %s31, 1
      %p80 = por %p78, %p79
      %p82 = scmp.ne.s32.totalorder %s65, %s81
      %p83 = scmp.eq.s32.totalorder %s31, 0
      %p84 = por %p82, %p83
      %s86 = sadd.s32 %s85, 1
      %p89 = scmp.eq.s32.totalorder %s25, 1
      %p90 = scmp.ne.s32.totalorder %s85, %s87
      %p91 = scmp.eq.s32.totalorder %s25, 0
      %p92 = por %p90, %p91
      %p93 = scmp.ne.s32.totalorder %s85, %s87
      %p94 = scmp.eq.s32.totalorder %s30, 1
      %p95 = por %p93, %p94
      %p96 = scmp.ne.s32.totalorder %s87, %s88
      %p97 = scmp.eq.s32.totalorder %s30, 0
      %p98 = por %p96, %p97
      %p99 = scmp.ne.s32.totalorder %s87, %s88
      %p100 = scmp.eq.s32.totalorder %s31, 1
      %p101 = por %p99, %p100
      %p103 = scmp.ne.s32.totalorder %s88, %s102
      %p104 = scmp.eq.s32.totalorder %s31, 0
      %p105 = por %p103, %p104
      %s107 = sadd.s32 %s106, 1
      %p110 = scmp.eq.s32.totalorder %s25, 1
      %p111 = scmp.ne.s32.totalorder %s106, %s108
      %p112 = scmp.eq.s32.totalorder %s25, 0
      %p113 = por %p111, %p112
      %p114 = scmp.ne.s32.totalorder %s106, %s108
      %p115 = scmp.eq.s32.totalorder %s30, 1
      %p116 = por %p114, %p115
      %p117 = scmp.ne.s32.totalorder %s108, %s109
      %p118 = scmp.eq.s32.totalorder %s30, 0
      %p119 = por %p117, %p118
      %p120 = scmp.ne.s32.totalorder %s108, %s109
      %p121 = scmp.eq.s32.totalorder %s31, 1
      %p122 = por %p120, %p121
      %p124 = scmp.ne.s32.totalorder %s109, %s123
      %p125 = scmp.eq.s32.totalorder %s31, 0
      %p126 = por %p124, %p125
      %s128 = sadd.s32 %s127, 1
      %p131 = scmp.eq.s32.totalorder %s25, 1
      %p132 = scmp.ne.s32.totalorder %s127, %s129
      %p133 = scmp.eq.s32.totalorder %s25, 0
      %p134 = por %p132, %p133
      %p135 = scmp.ne.s32.totalorder %s127, %s129
      %p136 = scmp.eq.s32.totalorder %s30, 1
      %p137 = por %p135, %p136
      %p138 = scmp.ne.s32.totalorder %s129, %s130
      %p139 = scmp.eq.s32.totalorder %s30, 0
      %p140 = por %p138, %p139
      %p141 = scmp.ne.s32.totalorder %s129, %s130
      %p142 = scmp.eq.s32.totalorder %s31, 1
      %p143 = por %p141, %p142
      %p145 = scmp.ne.s32.totalorder %s130, %s144
      %p146 = scmp.eq.s32.totalorder %s31, 0
      %p147 = por %p145, %p146
      %s149 = sadd.s32 %s148, 1
      %p152 = scmp.eq.s32.totalorder %s25, 1
      %p153 = scmp.ne.s32.totalorder %s148, %s150
      %p154 = scmp.eq.s32.totalorder %s25, 0
      %p155 = por %p153, %p154
      %p156 = scmp.ne.s32.totalorder %s148, %s150
      %p157 = scmp.eq.s32.totalorder %s30, 1
      %p158 = por %p156, %p157
      %p159 = scmp.ne.s32.totalorder %s150, %s151
      %p160 = scmp.eq.s32.totalorder %s30, 0
      %p161 = por %p159, %p160
      %p162 = scmp.ne.s32.totalorder %s150, %s151
      %p163 = scmp.eq.s32.totalorder %s31, 1
      %p164 = por %p162, %p163
      %p166 = scmp.ne.s32.totalorder %s151, %s165
      %p167 = scmp.eq.s32.totalorder %s31, 0
      %p168 = por %p166, %p167
      %s170 = sadd.s32 %s169, 1
      %p173 = scmp.eq.s32.totalorder %s25, 1
      %p174 = scmp.ne.s32.totalorder %s169, %s171
      %p175 = scmp.eq.s32.totalorder %s25, 0
      %p176 = por %p174, %p175
      %p177 = scmp.ne.s32.totalorder %s169, %s171
      %p178 = scmp.eq.s32.totalorder %s30, 1
      %p179 = por %p177, %p178
      %p180 = scmp.ne.s32.totalorder %s171, %s172
      %p181 = scmp.eq.s32.totalorder %s30, 0
      %p182 = por %p180, %p181
      %p183 = scmp.ne.s32.totalorder %s171, %s172
      %p184 = scmp.eq.s32.totalorder %s31, 1
      %p185 = por %p183, %p184
      %p187 = scmp.ne.s32.totalorder %s172, %s186
      %p188 = scmp.eq.s32.totalorder %s31, 0
      %p189 = por %p187, %p188
      %s191 = sadd.s32 %s190, 1
      %p194 = scmp.eq.s32.totalorder %s25, 1
      %p195 = scmp.ne.s32.totalorder %s190, %s192
      %p196 = scmp.eq.s32.totalorder %s25, 0
      %p197 = por %p195, %p196
      %p198 = scmp.ne.s32.totalorder %s190, %s192
      %p199 = scmp.eq.s32.totalorder %s30, 1
      %p200 = por %p198, %p199
      %p201 = scmp.ne.s32.totalorder %s192, %s193
      %p202 = scmp.eq.s32.totalorder %s30, 0
      %p203 = por %p201, %p202
      %p204 = scmp.ne.s32.totalorder %s192, %s193
      %p205 = scmp.eq.s32.totalorder %s31, 1
      %p206 = por %p204, %p205
      %p208 = scmp.ne.s32.totalorder %s193, %s207
      %p209 = scmp.eq.s32.totalorder %s31, 0
      %p210 = por %p208, %p209
      %s212 = sadd.s32 %s211, 1
      %p215 = scmp.eq.s32.totalorder %s25, 1
      %p216 = scmp.ne.s32.totalorder %s211, %s213
      %p217 = scmp.eq.s32.totalorder %s25, 0
      %p218 = por %p216, %p217
      %p219 = scmp.ne.s32.totalorder %s211, %s213
      %p220 = scmp.eq.s32.totalorder %s30, 1
      %p221 = por %p219, %p220
      %p222 = scmp.ne.s32.totalorder %s213, %s214
      %p223 = scmp.eq.s32.totalorder %s30, 0
      %p224 = por %p222, %p223
      %p225 = scmp.ne.s32.totalorder %s213, %s214
      %p226 = scmp.eq.s32.totalorder %s31, 1
      %p227 = por %p225, %p226
      %p229 = scmp.ne.s32.totalorder %s214, %s228
      %p230 = scmp.eq.s32.totalorder %s31, 0
      %p231 = por %p229, %p230
      %s233 = sadd.s32 %s232, 1
      %p236 = scmp.eq.s32.totalorder %s25, 1
      %p237 = scmp.ne.s32.totalorder %s232, %s234
      %p238 = scmp.eq.s32.totalorder %s25, 0
      %p239 = por %p237, %p238
      %p240 = scmp.ne.s32.totalorder %s232, %s234
      %p241 = scmp.eq.s32.totalorder %s30, 1
      %p242 = por %p240, %p241
      %p243 = scmp.ne.s32.totalorder %s234, %s235
      %p244 = scmp.eq.s32.totalorder %s30, 0
      %p245 = por %p243, %p244
      %p246 = scmp.ne.s32.totalorder %s234, %s235
      %p247 = scmp.eq.s32.totalorder %s31, 1
      %p248 = por %p246, %p247
      %p250 = scmp.ne.s32.totalorder %s235, %s249
      %p251 = scmp.eq.s32.totalorder %s31, 0
      %p252 = por %p250, %p251
      %s253 = ssub.s32 %s25, %s32
      %p254 = scmp.eq.s32.totalorder %s253, 0
      %s256 = sadd.s32 %s255, 1
      %s257 = scalar_select %p254, %s255, %s256
      %p260 = pneg %p254
      %p261 = scmp.eq.s32.totalorder %s25, 1
      %p262 = por %p260, %p261
      %p263 = scmp.ne.s32.totalorder %s255, %s258
      %p264 = scmp.eq.s32.totalorder %s25, 0
      %p265 = por %p263, %p264
      %p266 = scmp.ne.s32.totalorder %s255, %s258
      %p267 = scmp.eq.s32.totalorder %s30, 1
      %p268 = por %p266, %p267
      %p269 = scmp.ne.s32.totalorder %s258, %s259
      %p270 = scmp.eq.s32.totalorder %s30, 0
      %p271 = por %p269, %p270
      %p272 = scmp.ne.s32.totalorder %s258, %s259
      %p273 = scmp.eq.s32.totalorder %s31, 1
      %p274 = por %p272, %p273
      %p276 = scmp.ne.s32.totalorder %s259, %s275
      %p277 = scmp.eq.s32.totalorder %s31, 0
      %p278 = por %p276, %p277
      %s279 = ssub.s32 %s25, %s32
      %p280 = scmp.eq.s32.totalorder %s279, 0
      %s282 = sadd.s32 %s281, 1
      %s283 = scalar_select %p280, %s281, %s282
      %p286 = pneg %p280
      %p287 = scmp.eq.s32.totalorder %s25, 1
      %p288 = por %p286, %p287
      %p289 = scmp.ne.s32.totalorder %s281, %s284
      %p290 = scmp.eq.s32.totalorder %s25, 0
      %p291 = por %p289, %p290
      %p292 = scmp.ne.s32.totalorder %s281, %s284
      %p293 = scmp.eq.s32.totalorder %s30, 1
      %p294 = por %p292, %p293
      %p295 = scmp.ne.s32.totalorder %s284, %s285
      %p296 = scmp.eq.s32.totalorder %s30, 0
      %p297 = por %p295, %p296
      %p298 = scmp.ne.s32.totalorder %s284, %s285
      %p299 = scmp.eq.s32.totalorder %s31, 1
      %p300 = por %p298, %p299
      %p302 = scmp.ne.s32.totalorder %s285, %s301
      %p303 = scmp.eq.s32.totalorder %s31, 0
      %p304 = por %p302, %p303
      %s305 = ssub.s32 %s25, %s32
      %p306 = scmp.eq.s32.totalorder %s305, 0
      %s308 = sadd.s32 %s307, 1
      %s309 = scalar_select %p306, %s307, %s308
      %p312 = pneg %p306
      %p313 = scmp.eq.s32.totalorder %s25, 1
      %p314 = por %p312, %p313
      %p315 = scmp.ne.s32.totalorder %s307, %s310
      %p316 = scmp.eq.s32.totalorder %s25, 0
      %p317 = por %p315, %p316
      %p318 = scmp.ne.s32.totalorder %s307, %s310
      %p319 = scmp.eq.s32.totalorder %s30, 1
      %p320 = por %p318, %p319
      %p321 = scmp.ne.s32.totalorder %s310, %s311
      %p322 = scmp.eq.s32.totalorder %s30, 0
      %p323 = por %p321, %p322
      %p324 = scmp.ne.s32.totalorder %s310, %s311
      %p325 = scmp.eq.s32.totalorder %s31, 1
      %p326 = por %p324, %p325
      %p328 = scmp.ne.s32.totalorder %s311, %s327
      %p329 = scmp.eq.s32.totalorder %s31, 0
      %p330 = por %p328, %p329
      %p331 = scmp.le.s32.totalorder 1, %s25
      %p332 = scmp.lt.s32.totalorder %s25, 3
      %p333 = pnand %p331, %p332
      %p334 = pneg %p333
      // Predicated region
      $region9: #{vae_forward.1} parent=5 // pred_check
        _
      $region10: #{vae_forward.1} parent=5 // pred_check_branch
        %336 = sbr.rel (%p333) target = $region12
      $region11: #{vae_forward.1} parent=5 // pred_region
        %s337 = ssub.s32 %s25, 1
        // Predicated region
        $region13: #{vae_forward.1} parent=11 // pred_check
          %p338 = pneg %p98
        $region14: #{vae_forward.1} parent=11 // pred_check_branch
          %340 = sbr.rel (%p338) target = $region16
        $region15: #{vae_forward.1} parent=11 // pred_region
          _
        $region16: #{vae_forward.1} parent=11 // pred_fallthru
          _
        // Predicated region
        $region17: #{vae_forward.1} parent=11 // pred_check
          %p341 = pneg %p119
        $region18: #{vae_forward.1} parent=11 // pred_check_branch
          %343 = sbr.rel (%p341) target = $region20
        $region19: #{vae_forward.1} parent=11 // pred_region
          _
        $region20: #{vae_forward.1} parent=11 // pred_fallthru
          _
        // Predicated region
        $region21: #{vae_forward.1} parent=11 // pred_check
          %p344 = pneg %p140
        $region22: #{vae_forward.1} parent=11 // pred_check_branch
          %346 = sbr.rel (%p344) target = $region24
        $region23: #{vae_forward.1} parent=11 // pred_region
          _
        $region24: #{vae_forward.1} parent=11 // pred_fallthru
          _
        // Predicated region
        $region25: #{vae_forward.1} parent=11 // pred_check
          %p347 = pneg %p161
        $region26: #{vae_forward.1} parent=11 // pred_check_branch
          %349 = sbr.rel (%p347) target = $region28
        $region27: #{vae_forward.1} parent=11 // pred_region
          _
        $region28: #{vae_forward.1} parent=11 // pred_fallthru
          _
        // Predicated region
        $region29: #{vae_forward.1} parent=11 // pred_check
          %p350 = pneg %p182
        $region30: #{vae_forward.1} parent=11 // pred_check_branch
          %352 = sbr.rel (%p350) target = $region32
        $region31: #{vae_forward.1} parent=11 // pred_region
          _
        $region32: #{vae_forward.1} parent=11 // pred_fallthru
          _
        // Predicated region
        $region33: #{vae_forward.1} parent=11 // pred_check
          %p353 = pneg %p203
        $region34: #{vae_forward.1} parent=11 // pred_check_branch
          %355 = sbr.rel (%p353) target = $region36
        $region35: #{vae_forward.1} parent=11 // pred_region
          _
        $region36: #{vae_forward.1} parent=11 // pred_fallthru
          _
        // Predicated region
        $region37: #{vae_forward.1} parent=11 // pred_check
          %p356 = pneg %p224
        $region38: #{vae_forward.1} parent=11 // pred_check_branch
          %358 = sbr.rel (%p356) target = $region40
        $region39: #{vae_forward.1} parent=11 // pred_region
          _
        $region40: #{vae_forward.1} parent=11 // pred_fallthru
          _
        // Predicated region
        $region41: #{vae_forward.1} parent=11 // pred_check
          %p359 = pneg %p245
        $region42: #{vae_forward.1} parent=11 // pred_check_branch
          %361 = sbr.rel (%p359) target = $region44
        $region43: #{vae_forward.1} parent=11 // pred_region
          _
        $region44: #{vae_forward.1} parent=11 // pred_fallthru
          _
      $region12: #{vae_forward.1} parent=5 // pred_fallthru
        _
      %p362 = scmp.lt.s32.totalorder %s25, 2
      // Predicated region
      $region45: #{vae_forward.1} parent=5 // pred_check
        %p363 = pneg %p362
      $region46: #{vae_forward.1} parent=5 // pred_check_branch
        %365 = sbr.rel (%p363) target = $region48
      $region47: #{vae_forward.1} parent=5 // pred_region
        // Predicated region
        $region49: #{vae_forward.1} parent=47 // pred_check
          %p366 = pneg %p45
        $region50: #{vae_forward.1} parent=47 // pred_check_branch
          %368 = sbr.rel (%p366) target = $region52
        $region51: #{vae_forward.1} parent=47 // pred_region
          %s369 = smul.u32 16, %s25
          %p370 = scmp.lt.s32.totalorder %s369, 31
          %s371 = scalar_select %p370, %s369, 31
          %s372 = smul.addr %s371, 2
          %s373 = smul.addr %s372, 8
          %s374 = scalar_lea.vmem %s0, %s373
          %s375 = smul.u32 16, %s25
        $region52: #{vae_forward.1} parent=47 // pred_fallthru
          _
        // Predicated region
        $region53: #{vae_forward.1} parent=47 // pred_check
          %p376 = pneg %p71
        $region54: #{vae_forward.1} parent=47 // pred_check_branch
          %378 = sbr.rel (%p376) target = $region56
        $region55: #{vae_forward.1} parent=47 // pred_region
          %s379 = smul.u32 16, %s25
          %p380 = scmp.lt.s32.totalorder %s379, 31
          %s381 = scalar_select %p380, %s379, 31
          %s382 = smul.addr %s381, 8
          %s383 = scalar_lea.vmem %s1, %s382
          %s384 = smul.u32 16, %s25
        $region56: #{vae_forward.1} parent=47 // pred_fallthru
          _
      $region48: #{vae_forward.1} parent=5 // pred_fallthru
        _
      %p385 = scmp.le.s32.totalorder 1, %s25
      %p386 = scmp.lt.s32.totalorder %s25, 3
      %p387 = pnand %p385, %p386
      %p388 = pneg %p387
      // Predicated region
      $region57: #{vae_forward.1} parent=5 // pred_check
        _
      $region58: #{vae_forward.1} parent=5 // pred_check_branch
        %390 = sbr.rel (%p387) target = $region60
      $region59: #{vae_forward.1} parent=5 // pred_region
        %s391 = ssub.s32 %s25, 1
        %s392 = smul.u32 16, %s30
        %p393 = scmp.lt.s32.totalorder %s392, 31
        %s394 = scalar_select %p393, %s392, 31
        %s395 = smul.addr %s394, 2
        %s396 = smul.addr %s395, 8
        %s397 = scalar_lea.vmem %s0, %s396
        %p398 = pneg %p51
        %p399 = pneg %p48
        %s400 = smul.u32 16, %s30
        %p401 = scmp.lt.s32.totalorder %s400, 31
        %s402 = scalar_select %p401, %s400, 31
        %s403 = smul.addr %s402, 8
        %s404 = scalar_lea.vmem %s1, %s403
        %p405 = pneg %p77
        %p406 = pneg %p74
        %p407 = pneg %p98
        %p408 = pneg %p95
        %p409 = pneg %p119
        %p410 = pneg %p116
        %p411 = pneg %p140
        %p412 = pneg %p137
        %p413 = pneg %p161
        %p414 = pneg %p158
        %p415 = pneg %p182
        %p416 = pneg %p179
        %p417 = pneg %p203
        %p418 = pneg %p200
        %p419 = pneg %p224
        %p420 = pneg %p221
        %p421 = pneg %p245
        %p422 = pneg %p242
        %p423 = pneg %p271
        %p424 = pneg %p268
        %s425 = sand.u32 %s258, 1
        %s426 = scalar_lea.sflag [#allocation3], %s425
        %s427 = sand.u32 %s258, 1
        %s428 = smul.addr %s427, 256
        %s429 = scalar_lea.vmem [#allocation2], %s428
        %p430 = pneg %p297
        %p431 = pneg %p294
        %s432 = sand.u32 %s30, 1
        %s433 = scalar_lea.sflag [#allocation5], %s432
        %s434 = sand.u32 %s284, 1
        %s435 = smul.addr %s434, 128
        %s436 = scalar_lea.vmem [#allocation4], %s435
        %p437 = pneg %p323
        %p438 = pneg %p320
        %s439 = sand.u32 %s30, 1
        %s440 = scalar_lea.sflag [#allocation5], %s439
        %s441 = sand.u32 %s310, 1
        %s442 = smul.addr %s441, 128
        %s443 = scalar_lea.vmem [#allocation6], %s442
        %s444 = smul.u32 16, %s30
        %p445 = scmp.lt.s32.totalorder %s444, 31
        %s446 = scalar_select %p445, %s444, 31
        %s447 = smul.addr %s446, 2
        %s448 = smul.addr %s447, 8
        %s449 = scalar_lea.vmem %s0, %s448
        %s450 = smul.u32 16, %s30
        %s451 = smul.u32 16, %s30
        %p452 = scmp.lt.s32.totalorder %s451, 31
        %s453 = scalar_select %p452, %s451, 31
        %s454 = smul.addr %s453, 8
        %s455 = scalar_lea.vmem %s1, %s454
        %s456 = smul.u32 16, %s30
        %s457 = smul.u32 16, %s30
        %s458 = smul.u32 16, %s30
        %s459 = smul.u32 16, %s30
        %v461 = vld [vmem:[%s449] sm:$0xff]
        %v462 = vld [vmem:[%s449 + $0x8] sm:$0xff]
        %v463 = vld [vmem:[%s449 + $0x10] sm:$0xff]
        %v464 = vld [vmem:[%s449 + $0x18] sm:$0xff]
        %v465 = vld [vmem:[%s449 + $0x20] sm:$0xff]
        %v466 = vld [vmem:[%s449 + $0x28] sm:$0xff]
        %v467 = vld [vmem:[%s449 + $0x30] sm:$0xff]
        %v468 = vld [vmem:[%s449 + $0x38] sm:$0xff]
        %v469 = vld [vmem:[%s449 + $0x40] sm:$0xff]
        %v470 = vld [vmem:[%s449 + $0x48] sm:$0xff]
        %v471 = vld [vmem:[%s449 + $0x50] sm:$0xff]
        %v472 = vld [vmem:[%s449 + $0x58] sm:$0xff]
        %v473 = vld [vmem:[%s449 + $0x60] sm:$0xff]
        %v474 = vld [vmem:[%s449 + $0x68] sm:$0xff]
        %v475 = vld [vmem:[%s449 + $0x70] sm:$0xff]
        %v476 = vld [vmem:[%s449 + $0x78] sm:$0xff]
        %v477 = vld [vmem:[%s449 + $0x80] sm:$0xff]
        %v478 = vld [vmem:[%s449 + $0x88] sm:$0xff]
        %v479 = vld [vmem:[%s449 + $0x90] sm:$0xff]
        %v480 = vld [vmem:[%s449 + $0x98] sm:$0xff]
        %v481 = vld [vmem:[%s449 + $0xa0] sm:$0xff]
        %v482 = vld [vmem:[%s449 + $0xa8] sm:$0xff]
        %v483 = vld [vmem:[%s449 + $0xb0] sm:$0xff]
        %v484 = vld [vmem:[%s449 + $0xb8] sm:$0xff]
        %v485 = vld [vmem:[%s449 + $0xc0] sm:$0xff]
        %v486 = vld [vmem:[%s449 + $0xc8] sm:$0xff]
        %v487 = vld [vmem:[%s449 + $0xd0] sm:$0xff]
        %v488 = vld [vmem:[%s449 + $0xd8] sm:$0xff]
        %v489 = vld [vmem:[%s449 + $0xe0] sm:$0xff]
        %v490 = vld [vmem:[%s449 + $0xe8] sm:$0xff]
        %v491 = vld [vmem:[%s449 + $0xf0] sm:$0xff]
        %v492 = vld [vmem:[%s449 + $0xf8] sm:$0xff]
        %v493 = vpack.c.bf16 %v463, %v461
        %v494 = vpack.c.bf16 %v464, %v462
        %v495 = vpack.c.bf16 %v467, %v465
        %v496 = vpack.c.bf16 %v468, %v466
        %v497 = vpack.c.bf16 %v471, %v469
        %v498 = vpack.c.bf16 %v472, %v470
        %v499 = vpack.c.bf16 %v475, %v473
        %v500 = vpack.c.bf16 %v476, %v474
        %v501 = vpack.c.bf16 %v479, %v477
        %v502 = vpack.c.bf16 %v480, %v478
        %v503 = vpack.c.bf16 %v483, %v481
        %v504 = vpack.c.bf16 %v484, %v482
        %v505 = vpack.c.bf16 %v487, %v485
        %v506 = vpack.c.bf16 %v488, %v486
        %v507 = vpack.c.bf16 %v491, %v489
        %v508 = vpack.c.bf16 %v492, %v490
        %v509 = vld [vmem:[%s455] sm:$0xff]
        %v510 = vld [vmem:[%s455 + $0x8] sm:$0xff]
        %v511 = vld [vmem:[%s455 + $0x10] sm:$0xff]
        %v512 = vld [vmem:[%s455 + $0x18] sm:$0xff]
        %v513 = vld [vmem:[%s455 + $0x20] sm:$0xff]
        %v514 = vld [vmem:[%s455 + $0x28] sm:$0xff]
        %v515 = vld [vmem:[%s455 + $0x30] sm:$0xff]
        %v516 = vld [vmem:[%s455 + $0x38] sm:$0xff]
        %v517 = vld [vmem:[%s455 + $0x40] sm:$0xff]
        %v518 = vld [vmem:[%s455 + $0x48] sm:$0xff]
        %v519 = vld [vmem:[%s455 + $0x50] sm:$0xff]
        %v520 = vld [vmem:[%s455 + $0x58] sm:$0xff]
        %v521 = vld [vmem:[%s455 + $0x60] sm:$0xff]
        %v522 = vld [vmem:[%s455 + $0x68] sm:$0xff]
        %v523 = vld [vmem:[%s455 + $0x70] sm:$0xff]
        %v524 = vld [vmem:[%s455 + $0x78] sm:$0xff]
        %v525 = vld [vmem:[%s2] sm:$0xff]
        %v526 = vld [vmem:[%s2 + $0x8] sm:$0xff]
        %v527 = vld [vmem:[%s2 + $0x10] sm:$0xff]
        %v528 = vld [vmem:[%s2 + $0x18] sm:$0xff]
        %v529 = vld [vmem:[%s2 + $0x20] sm:$0xff]
        %v530 = vld [vmem:[%s2 + $0x28] sm:$0xff]
        %v531 = vld [vmem:[%s2 + $0x30] sm:$0xff]
        %v532 = vld [vmem:[%s2 + $0x38] sm:$0xff]
        %v533 = vld [vmem:[%s2 + $0x40] sm:$0xff]
        %v534 = vld [vmem:[%s2 + $0x48] sm:$0xff]
        %v535 = vld [vmem:[%s2 + $0x50] sm:$0xff]
        %v536 = vld [vmem:[%s2 + $0x58] sm:$0xff]
        %v537 = vld [vmem:[%s2 + $0x60] sm:$0xff]
        %v538 = vld [vmem:[%s2 + $0x68] sm:$0xff]
        %v539 = vld [vmem:[%s2 + $0x70] sm:$0xff]
        %v540 = vld [vmem:[%s2 + $0x78] sm:$0xff]
        %v541 = vld [vmem:[%s2 + $0x80] sm:$0xff]
        %v542 = vld [vmem:[%s2 + $0x88] sm:$0xff]
        %v543 = vld [vmem:[%s2 + $0x90] sm:$0xff]
        %v544 = vld [vmem:[%s2 + $0x98] sm:$0xff]
        %v545 = vld [vmem:[%s2 + $0xa0] sm:$0xff]
        %v546 = vld [vmem:[%s2 + $0xa8] sm:$0xff]
        %v547 = vld [vmem:[%s2 + $0xb0] sm:$0xff]
        %v548 = vld [vmem:[%s2 + $0xb8] sm:$0xff]
        %v549 = vld [vmem:[%s2 + $0xc0] sm:$0xff]
        %v550 = vld [vmem:[%s2 + $0xc8] sm:$0xff]
        %v551 = vld [vmem:[%s2 + $0xd0] sm:$0xff]
        %v552 = vld [vmem:[%s2 + $0xd8] sm:$0xff]
        %v553 = vld [vmem:[%s2 + $0xe0] sm:$0xff]
        %v554 = vld [vmem:[%s2 + $0xe8] sm:$0xff]
        %v555 = vld [vmem:[%s2 + $0xf0] sm:$0xff]
        %v556 = vld [vmem:[%s2 + $0xf8] sm:$0xff]
        %v557 = vld [vmem:[%s3] sm:$0x3]
        %v559 = vlaneseq
        %v560 = vshrl.u32 %v559, 7
        %v561 = vsub.s32 0, %v560
        %v562 = vrot.slane %v557, %v561
        %v563 = vlaneseq
        %v564 = vshrl.u32 %v563, 7
        %v565 = vsub.s32 1, %v564
        %v566 = vrot.slane %v557, %v565
        %v601 = vunpack.c.l.b16 %v525
        %v602 = vunpack.c.h.b16 %v525
        %v603 = vunpack.c.l.b16 %v526
        %v604 = vunpack.c.h.b16 %v526
        %v605 = vunpack.c.l.b16 %v527
        %v606 = vunpack.c.h.b16 %v527
        %v607 = vunpack.c.l.b16 %v528
        %v608 = vunpack.c.h.b16 %v528
        %v609 = vunpack.c.l.b16 %v529
        %v610 = vunpack.c.h.b16 %v529
        %v611 = vunpack.c.l.b16 %v530
        %v612 = vunpack.c.h.b16 %v530
        %v613 = vunpack.c.l.b16 %v531
        %v614 = vunpack.c.h.b16 %v531
        %v615 = vunpack.c.l.b16 %v532
        %v616 = vunpack.c.h.b16 %v532
        %v617 = vunpack.c.l.b16 %v533
        %v618 = vunpack.c.h.b16 %v533
        %v619 = vunpack.c.l.b16 %v534
        %v620 = vunpack.c.h.b16 %v534
        %v621 = vunpack.c.l.b16 %v535
        %v622 = vunpack.c.h.b16 %v535
        %v623 = vunpack.c.l.b16 %v536
        %v624 = vunpack.c.h.b16 %v536
        %v625 = vunpack.c.l.b16 %v537
        %v626 = vunpack.c.h.b16 %v537
        %v627 = vunpack.c.l.b16 %v538
        %v628 = vunpack.c.h.b16 %v538
        %v629 = vunpack.c.l.b16 %v539
        %v630 = vunpack.c.h.b16 %v539
        %v631 = vunpack.c.l.b16 %v540
        %v632 = vunpack.c.h.b16 %v540
        %v633 = vunpack.c.l.b16 %v541
        %v634 = vunpack.c.h.b16 %v541
        %v635 = vunpack.c.l.b16 %v542
        %v636 = vunpack.c.h.b16 %v542
        %v637 = vunpack.c.l.b16 %v543
        %v638 = vunpack.c.h.b16 %v543
        %v639 = vunpack.c.l.b16 %v544
        %v640 = vunpack.c.h.b16 %v544
        %v641 = vunpack.c.l.b16 %v545
        %v642 = vunpack.c.h.b16 %v545
        %v643 = vunpack.c.l.b16 %v546
        %v644 = vunpack.c.h.b16 %v546
        %v645 = vunpack.c.l.b16 %v547
        %v646 = vunpack.c.h.b16 %v547
        %v647 = vunpack.c.l.b16 %v548
        %v648 = vunpack.c.h.b16 %v548
        %v649 = vunpack.c.l.b16 %v549
        %v650 = vunpack.c.h.b16 %v549
        %v651 = vunpack.c.l.b16 %v550
        %v652 = vunpack.c.h.b16 %v550
        %v653 = vunpack.c.l.b16 %v551
        %v654 = vunpack.c.h.b16 %v551
        %v655 = vunpack.c.l.b16 %v552
        %v656 = vunpack.c.h.b16 %v552
        %v657 = vunpack.c.l.b16 %v553
        %v658 = vunpack.c.h.b16 %v553
        %v659 = vunpack.c.l.b16 %v554
        %v660 = vunpack.c.h.b16 %v554
        %v661 = vunpack.c.l.b16 %v555
        %v662 = vunpack.c.h.b16 %v555
        %v663 = vunpack.c.l.b16 %v556
        %v664 = vunpack.c.h.b16 %v556
        %v665 = vpack.c.b16 %v603, %v601
        %v666 = vpack.c.b16 %v604, %v602
        %v667 = vpack.c.b16 %v607, %v605
        %v668 = vpack.c.b16 %v608, %v606
        %v669 = vpack.c.b16 %v611, %v609
        %v670 = vpack.c.b16 %v612, %v610
        %v671 = vpack.c.b16 %v615, %v613
        %v672 = vpack.c.b16 %v616, %v614
        %v673 = vpack.c.b16 %v619, %v617
        %v674 = vpack.c.b16 %v620, %v618
        %v675 = vpack.c.b16 %v623, %v621
        %v676 = vpack.c.b16 %v624, %v622
        %v677 = vpack.c.b16 %v627, %v625
        %v678 = vpack.c.b16 %v628, %v626
        %v679 = vpack.c.b16 %v631, %v629
        %v680 = vpack.c.b16 %v632, %v630
        %v681 = vpack.c.b16 %v635, %v633
        %v682 = vpack.c.b16 %v636, %v634
        %v683 = vpack.c.b16 %v639, %v637
        %v684 = vpack.c.b16 %v640, %v638
        %v685 = vpack.c.b16 %v643, %v641
        %v686 = vpack.c.b16 %v644, %v642
        %v687 = vpack.c.b16 %v647, %v645
        %v688 = vpack.c.b16 %v648, %v646
        %v689 = vpack.c.b16 %v651, %v649
        %v690 = vpack.c.b16 %v652, %v650
        %v691 = vpack.c.b16 %v655, %v653
        %v692 = vpack.c.b16 %v656, %v654
        %v693 = vpack.c.b16 %v659, %v657
        %v694 = vpack.c.b16 %v660, %v658
        %v695 = vpack.c.b16 %v663, %v661
        %v696 = vpack.c.b16 %v664, %v662
        %729 = vmatprep.subr.bf16.mxu0 %v666
        %730 = vmatpush1.bf16.msra.mxu0 %v665
        %731 = vmatprep.subr.bf16.mxu0 %v668
        %732 = vmatpush1.bf16.msra.mxu0 %v667
        %733 = vmatprep.subr.bf16.mxu0 %v670
        %734 = vmatpush1.bf16.msra.mxu0 %v669
        %735 = vmatprep.subr.bf16.mxu0 %v672
        %736 = vmatpush1.bf16.msra.mxu0 %v671
        %737 = vmatprep.subr.bf16.mxu0 %v674
        %738 = vmatpush1.bf16.msra.mxu0 %v673
        %739 = vmatprep.subr.bf16.mxu0 %v676
        %740 = vmatpush1.bf16.msra.mxu0 %v675
        %741 = vmatprep.subr.bf16.mxu0 %v678
        %742 = vmatpush1.bf16.msra.mxu0 %v677
        %743 = vmatprep.subr.bf16.mxu0 %v680
        %744 = vmatpush1.bf16.msra.mxu0 %v679
        %745 = vmatprep.subr.bf16.mxu0 %v682
        %746 = vmatpush1.bf16.msra.mxu0 %v681
        %747 = vmatprep.subr.bf16.mxu0 %v684
        %748 = vmatpush1.bf16.msra.mxu0 %v683
        %749 = vmatprep.subr.bf16.mxu0 %v686
        %750 = vmatpush1.bf16.msra.mxu0 %v685
        %751 = vmatprep.subr.bf16.mxu0 %v688
        %752 = vmatpush1.bf16.msra.mxu0 %v687
        %753 = vmatprep.subr.bf16.mxu0 %v690
        %754 = vmatpush1.bf16.msra.mxu0 %v689
        %755 = vmatprep.subr.bf16.mxu0 %v692
        %756 = vmatpush1.bf16.msra.mxu0 %v691
        %757 = vmatprep.subr.bf16.mxu0 %v694
        %758 = vmatpush1.bf16.msra.mxu0 %v693
        %759 = vmatprep.subr.bf16.mxu0 %v696
        %760 = vmatpush1.bf16.msra.mxu0 %v695
        %761 = vmatprep.mubr.bf16.mxu0 %v494
        %762 = vmatmul.mubr.bf16.gmra.mrb[0].mxu0 %v493
        %v763 = vpop.f32.mrb[0].mxu0
        %v764 = vadd.f32 %v562, %v763
        %v765 = vpop.f32.mrb[0].mxu0
        %v766 = vadd.f32 %v566, %v765
        %v767 = vpop.f32.mrb[0].mxu0
        %v768 = vadd.f32 %v562, %v767
        %v769 = vpop.f32.mrb[0].mxu0
        %v770 = vadd.f32 %v566, %v769
        %771 = vmatprep.mubr.bf16.mxu0 %v496
        %772 = vmatmul.mubr.bf16.gmra.mrb[0].mxu0 %v495
        %v773 = vpop.f32.mrb[0].mxu0
        %v774 = vadd.f32 %v562, %v773
        %v775 = vpop.f32.mrb[0].mxu0
        %v776 = vadd.f32 %v566, %v775
        %v777 = vpop.f32.mrb[0].mxu0
        %v778 = vadd.f32 %v562, %v777
        %v779 = vpop.f32.mrb[0].mxu0
        %v780 = vadd.f32 %v566, %v779
        %781 = vmatprep.mubr.bf16.mxu0 %v498
        %782 = vmatmul.mubr.bf16.gmra.mrb[0].mxu0 %v497
        %v783 = vpop.f32.mrb[0].mxu0
        %v784 = vadd.f32 %v562, %v783
        %v785 = vpop.f32.mrb[0].mxu0
        %v786 = vadd.f32 %v566, %v785
        %v787 = vpop.f32.mrb[0].mxu0
        %v788 = vadd.f32 %v562, %v787
        %v789 = vpop.f32.mrb[0].mxu0
        %v790 = vadd.f32 %v566, %v789
        %791 = vmatprep.mubr.bf16.mxu0 %v500
        %792 = vmatmul.mubr.bf16.gmra.mrb[0].mxu0 %v499
        %v793 = vpop.f32.mrb[0].mxu0
        %v794 = vadd.f32 %v562, %v793
        %v795 = vpop.f32.mrb[0].mxu0
        %v796 = vadd.f32 %v566, %v795
        %v797 = vpop.f32.mrb[0].mxu0
        %v798 = vadd.f32 %v562, %v797
        %v799 = vpop.f32.mrb[0].mxu0
        %v800 = vadd.f32 %v566, %v799
        %801 = vmatprep.mubr.bf16.mxu0 %v502
        %802 = vmatmul.mubr.bf16.gmra.mrb[0].mxu0 %v501
        %v803 = vpop.f32.mrb[0].mxu0
        %v804 = vadd.f32 %v562, %v803
        %v805 = vpop.f32.mrb[0].mxu0
        %v806 = vadd.f32 %v566, %v805
        %v807 = vpop.f32.mrb[0].mxu0
        %v808 = vadd.f32 %v562, %v807
        %v809 = vpop.f32.mrb[0].mxu0
        %v810 = vadd.f32 %v566, %v809
        %811 = vmatprep.mubr.bf16.mxu0 %v504
        %812 = vmatmul.mubr.bf16.gmra.mrb[0].mxu0 %v503
        %v813 = vpop.f32.mrb[0].mxu0
        %v814 = vadd.f32 %v562, %v813
        %v815 = vpop.f32.mrb[0].mxu0
        %v816 = vadd.f32 %v566, %v815
        %v817 = vpop.f32.mrb[0].mxu0
        %v818 = vadd.f32 %v562, %v817
        %v819 = vpop.f32.mrb[0].mxu0
        %v820 = vadd.f32 %v566, %v819
        %821 = vmatprep.mubr.bf16.mxu0 %v506
        %822 = vmatmul.mubr.bf16.gmra.mrb[0].mxu0 %v505
        %v823 = vpop.f32.mrb[0].mxu0
        %v824 = vadd.f32 %v562, %v823
        %v825 = vpop.f32.mrb[0].mxu0
        %v826 = vadd.f32 %v566, %v825
        %v827 = vpop.f32.mrb[0].mxu0
        %v828 = vadd.f32 %v562, %v827
        %v829 = vpop.f32.mrb[0].mxu0
        %v830 = vadd.f32 %v566, %v829
        %831 = vmatprep.mubr.bf16.mxu0 %v508
        %832 = vmatmul.mubr.bf16.gmra.mrb[0].mxu0 %v507
        %v833 = vpop.f32.mrb[0].mxu0
        %v834 = vadd.f32 %v562, %v833
        %v835 = vpop.f32.mrb[0].mxu0
        %v836 = vadd.f32 %v566, %v835
        %v837 = vpop.f32.mrb[0].mxu0
        %v838 = vadd.f32 %v562, %v837
        %v839 = vpop.f32.mrb[0].mxu0
        %v840 = vadd.f32 %v566, %v839
        %841 = vdwg.mxu0
        %v842 = vmax.f32 %v764, 0.0
        %v843 = vmax.f32 %v766, 0.0
        %v844 = vmax.f32 %v768, 0.0
        %v845 = vmax.f32 %v770, 0.0
        %v846 = vmax.f32 %v774, 0.0
        %v847 = vmax.f32 %v776, 0.0
        %v848 = vmax.f32 %v778, 0.0
        %v849 = vmax.f32 %v780, 0.0
        %v850 = vmax.f32 %v784, 0.0
        %v851 = vmax.f32 %v786, 0.0
        %v852 = vmax.f32 %v788, 0.0
        %v853 = vmax.f32 %v790, 0.0
        %v854 = vmax.f32 %v794, 0.0
        %v855 = vmax.f32 %v796, 0.0
        %v856 = vmax.f32 %v798, 0.0
        %v857 = vmax.f32 %v800, 0.0
        %v858 = vmax.f32 %v804, 0.0
        %v859 = vmax.f32 %v806, 0.0
        %v860 = vmax.f32 %v808, 0.0
        %v861 = vmax.f32 %v810, 0.0
        %v862 = vmax.f32 %v814, 0.0
        %v863 = vmax.f32 %v816, 0.0
        %v864 = vmax.f32 %v818, 0.0
        %v865 = vmax.f32 %v820, 0.0
        %v866 = vmax.f32 %v824, 0.0
        %v867 = vmax.f32 %v826, 0.0
        %v868 = vmax.f32 %v828, 0.0
        %v869 = vmax.f32 %v830, 0.0
        %v870 = vmax.f32 %v834, 0.0
        %v871 = vmax.f32 %v836, 0.0
        %v872 = vmax.f32 %v838, 0.0
        %v873 = vmax.f32 %v840, 0.0
        %v874 = vpack.c.bf16 %v844, %v842
        %v875 = vpack.c.bf16 %v845, %v843
        %v876 = vpack.c.bf16 %v848, %v846
        %v877 = vpack.c.bf16 %v849, %v847
        %v878 = vpack.c.bf16 %v852, %v850
        %v879 = vpack.c.bf16 %v853, %v851
        %v880 = vpack.c.bf16 %v856, %v854
        %v881 = vpack.c.bf16 %v857, %v855
        %v882 = vpack.c.bf16 %v860, %v858
        %v883 = vpack.c.bf16 %v861, %v859
        %v884 = vpack.c.bf16 %v864, %v862
        %v885 = vpack.c.bf16 %v865, %v863
        %v886 = vpack.c.bf16 %v868, %v866
        %v887 = vpack.c.bf16 %v869, %v867
        %v888 = vpack.c.bf16 %v872, %v870
        %v889 = vpack.c.bf16 %v873, %v871
        %v890 = vld [vmem:[%s4] sm:$0xff]
        %v891 = vld [vmem:[%s4 + $0x8] sm:$0xff]
        %v892 = vld [vmem:[%s4 + $0x10] sm:$0xff]
        %v893 = vld [vmem:[%s4 + $0x18] sm:$0xff]
        %v894 = vld [vmem:[%s4 + $0x20] sm:$0xff]
        %v895 = vld [vmem:[%s4 + $0x28] sm:$0xff]
        %v896 = vld [vmem:[%s4 + $0x30] sm:$0xff]
        %v897 = vld [vmem:[%s4 + $0x38] sm:$0xff]
        %v898 = vld [vmem:[%s4 + $0x40] sm:$0xff]
        %v899 = vld [vmem:[%s4 + $0x48] sm:$0xff]
        %v900 = vld [vmem:[%s4 + $0x50] sm:$0xff]
        %v901 = vld [vmem:[%s4 + $0x58] sm:$0xff]
        %v902 = vld [vmem:[%s4 + $0x60] sm:$0xff]
        %v903 = vld [vmem:[%s4 + $0x68] sm:$0xff]
        %v904 = vld [vmem:[%s4 + $0x70] sm:$0xff]
        %v905 = vld [vmem:[%s4 + $0x78] sm:$0xff]
        %v906 = vld [vmem:[%s4 + $0x80] sm:$0xff]
        %v907 = vld [vmem:[%s4 + $0x88] sm:$0xff]
        %v908 = vld [vmem:[%s4 + $0x90] sm:$0xff]
        %v909 = vld [vmem:[%s4 + $0x98] sm:$0xff]
        %v910 = vld [vmem:[%s4 + $0xa0] sm:$0xff]
        %v911 = vld [vmem:[%s4 + $0xa8] sm:$0xff]
        %v912 = vld [vmem:[%s4 + $0xb0] sm:$0xff]
        %v913 = vld [vmem:[%s4 + $0xb8] sm:$0xff]
        %v914 = vld [vmem:[%s4 + $0xc0] sm:$0xff]
        %v915 = vld [vmem:[%s4 + $0xc8] sm:$0xff]
        %v916 = vld [vmem:[%s4 + $0xd0] sm:$0xff]
        %v917 = vld [vmem:[%s4 + $0xd8] sm:$0xff]
        %v918 = vld [vmem:[%s4 + $0xe0] sm:$0xff]
        %v919 = vld [vmem:[%s4 + $0xe8] sm:$0xff]
        %v920 = vld [vmem:[%s4 + $0xf0] sm:$0xff]
        %v921 = vld [vmem:[%s4 + $0xf8] sm:$0xff]
        %v922 = vld [vmem:[%s5] sm:$0x3]
        %v924 = vlaneseq
        %v925 = vshrl.u32 %v924, 7
        %v926 = vsub.s32 0, %v925
        %v927 = vrot.slane %v922, %v926
        %v928 = vlaneseq
        %v929 = vshrl.u32 %v928, 7
        %v930 = vsub.s32 1, %v929
        %v931 = vrot.slane %v922, %v930
        %v966 = vunpack.c.l.b16 %v890
        %v967 = vunpack.c.h.b16 %v890
        %v968 = vunpack.c.l.b16 %v891
        %v969 = vunpack.c.h.b16 %v891
        %v970 = vunpack.c.l.b16 %v892
        %v971 = vunpack.c.h.b16 %v892
        %v972 = vunpack.c.l.b16 %v893
        %v973 = vunpack.c.h.b16 %v893
        %v974 = vunpack.c.l.b16 %v894
        %v975 = vunpack.c.h.b16 %v894
        %v976 = vunpack.c.l.b16 %v895
        %v977 = vunpack.c.h.b16 %v895
        %v978 = vunpack.c.l.b16 %v896
        %v979 = vunpack.c.h.b16 %v896
        %v980 = vunpack.c.l.b16 %v897
        %v981 = vunpack.c.h.b16 %v897
        %v982 = vunpack.c.l.b16 %v898
        %v983 = vunpack.c.h.b16 %v898
        %v984 = vunpack.c.l.b16 %v899
        %v985 = vunpack.c.h.b16 %v899
        %v986 = vunpack.c.l.b16 %v900
        %v987 = vunpack.c.h.b16 %v900
        %v988 = vunpack.c.l.b16 %v901
        %v989 = vunpack.c.h.b16 %v901
        %v990 = vunpack.c.l.b16 %v902
        %v991 = vunpack.c.h.b16 %v902
        %v992 = vunpack.c.l.b16 %v903
        %v993 = vunpack.c.h.b16 %v903
        %v994 = vunpack.c.l.b16 %v904
        %v995 = vunpack.c.h.b16 %v904
        %v996 = vunpack.c.l.b16 %v905
        %v997 = vunpack.c.h.b16 %v905
        %v998 = vunpack.c.l.b16 %v906
        %v999 = vunpack.c.h.b16 %v906
        %v1000 = vunpack.c.l.b16 %v907
        %v1001 = vunpack.c.h.b16 %v907
        %v1002 = vunpack.c.l.b16 %v908
        %v1003 = vunpack.c.h.b16 %v908
        %v1004 = vunpack.c.l.b16 %v909
        %v1005 = vunpack.c.h.b16 %v909
        %v1006 = vunpack.c.l.b16 %v910
        %v1007 = vunpack.c.h.b16 %v910
        %v1008 = vunpack.c.l.b16 %v911
        %v1009 = vunpack.c.h.b16 %v911
        %v1010 = vunpack.c.l.b16 %v912
        %v1011 = vunpack.c.h.b16 %v912
        %v1012 = vunpack.c.l.b16 %v913
        %v1013 = vunpack.c.h.b16 %v913
        %v1014 = vunpack.c.l.b16 %v914
        %v1015 = vunpack.c.h.b16 %v914
        %v1016 = vunpack.c.l.b16 %v915
        %v1017 = vunpack.c.h.b16 %v915
        %v1018 = vunpack.c.l.b16 %v916
        %v1019 = vunpack.c.h.b16 %v916
        %v1020 = vunpack.c.l.b16 %v917
        %v1021 = vunpack.c.h.b16 %v917
        %v1022 = vunpack.c.l.b16 %v918
        %v1023 = vunpack.c.h.b16 %v918
        %v1024 = vunpack.c.l.b16 %v919
        %v1025 = vunpack.c.h.b16 %v919
        %v1026 = vunpack.c.l.b16 %v920
        %v1027 = vunpack.c.h.b16 %v920
        %v1028 = vunpack.c.l.b16 %v921
        %v1029 = vunpack.c.h.b16 %v921
        %v1030 = vpack.c.b16 %v968, %v966
        %v1031 = vpack.c.b16 %v969, %v967
        %v1032 = vpack.c.b16 %v972, %v970
        %v1033 = vpack.c.b16 %v973, %v971
        %v1034 = vpack.c.b16 %v976, %v974
        %v1035 = vpack.c.b16 %v977, %v975
        %v1036 = vpack.c.b16 %v980, %v978
        %v1037 = vpack.c.b16 %v981, %v979
        %v1038 = vpack.c.b16 %v984, %v982
        %v1039 = vpack.c.b16 %v985, %v983
        %v1040 = vpack.c.b16 %v988, %v986
        %v1041 = vpack.c.b16 %v989, %v987
        %v1042 = vpack.c.b16 %v992, %v990
        %v1043 = vpack.c.b16 %v993, %v991
        %v1044 = vpack.c.b16 %v996, %v994
        %v1045 = vpack.c.b16 %v997, %v995
        %v1046 = vpack.c.b16 %v1000, %v998
        %v1047 = vpack.c.b16 %v1001, %v999
        %v1048 = vpack.c.b16 %v1004, %v1002
        %v1049 = vpack.c.b16 %v1005, %v1003
        %v1050 = vpack.c.b16 %v1008, %v1006
        %v1051 = vpack.c.b16 %v1009, %v1007
        %v1052 = vpack.c.b16 %v1012, %v1010
        %v1053 = vpack.c.b16 %v1013, %v1011
        %v1054 = vpack.c.b16 %v1016, %v1014
        %v1055 = vpack.c.b16 %v1017, %v1015
        %v1056 = vpack.c.b16 %v1020, %v1018
        %v1057 = vpack.c.b16 %v1021, %v1019
        %v1058 = vpack.c.b16 %v1024, %v1022
        %v1059 = vpack.c.b16 %v1025, %v1023
        %v1060 = vpack.c.b16 %v1028, %v1026
        %v1061 = vpack.c.b16 %v1029, %v1027
        %1094 = vmatprep.subr.bf16.mxu0 %v1031
        %1095 = vmatpush1.bf16.msra.mxu0 %v1030
        %1096 = vmatprep.subr.bf16.mxu0 %v1033
        %1097 = vmatpush1.bf16.msra.mxu0 %v1032
        %1098 = vmatprep.subr.bf16.mxu0 %v1035
        %1099 = vmatpush1.bf16.msra.mxu0 %v1034
        %1100 = vmatprep.subr.bf16.mxu0 %v1037
        %1101 = vmatpush1.bf16.msra.mxu0 %v1036
        %1102 = vmatprep.subr.bf16.mxu0 %v1039
        %1103 = vmatpush1.bf16.msra.mxu0 %v1038
        %1104 = vmatprep.subr.bf16.mxu0 %v1041
        %1105 = vmatpush1.bf16.msra.mxu0 %v1040
        %1106 = vmatprep.subr.bf16.mxu0 %v1043
        %1107 = vmatpush1.bf16.msra.mxu0 %v1042
        %1108 = vmatprep.subr.bf16.mxu0 %v1045
        %1109 = vmatpush1.bf16.msra.mxu0 %v1044
        %1110 = vmatprep.subr.bf16.mxu0 %v1047
        %1111 = vmatpush1.bf16.msra.mxu0 %v1046
        %1112 = vmatprep.subr.bf16.mxu0 %v1049
        %1113 = vmatpush1.bf16.msra.mxu0 %v1048
        %1114 = vmatprep.subr.bf16.mxu0 %v1051
        %1115 = vmatpush1.bf16.msra.mxu0 %v1050
        %1116 = vmatprep.subr.bf16.mxu0 %v1053
        %1117 = vmatpush1.bf16.msra.mxu0 %v1052
        %1118 = vmatprep.subr.bf16.mxu0 %v1055
        %1119 = vmatpush1.bf16.msra.mxu0 %v1054
        %1120 = vmatprep.subr.bf16.mxu0 %v1057
        %1121 = vmatpush1.bf16.msra.mxu0 %v1056
        %1122 = vmatprep.subr.bf16.mxu0 %v1059
        %1123 = vmatpush1.bf16.msra.mxu0 %v1058
        %1124 = vmatprep.subr.bf16.mxu0 %v1061
        %1125 = vmatpush1.bf16.msra.mxu0 %v1060
        %1126 = vmatprep.mubr.bf16.mxu0 %v875
        %1127 = vmatmul.mubr.bf16.gmra.mrb[0].mxu0 %v874
        %v1128 = vpop.f32.mrb[0].mxu0
        %v1129 = vadd.f32 %v927, %v1128
        %v1130 = vpop.f32.mrb[0].mxu0
        %v1131 = vadd.f32 %v931, %v1130
        %v1132 = vpop.f32.mrb[0].mxu0
        %v1133 = vadd.f32 %v927, %v1132
        %v1134 = vpop.f32.mrb[0].mxu0
        %v1135 = vadd.f32 %v931, %v1134
        %1136 = vmatprep.mubr.bf16.mxu0 %v877
        %1137 = vmatmul.mubr.bf16.gmra.mrb[0].mxu0 %v876
        %v1138 = vpop.f32.mrb[0].mxu0
        %v1139 = vadd.f32 %v927, %v1138
        %v1140 = vpop.f32.mrb[0].mxu0
        %v1141 = vadd.f32 %v931, %v1140
        %v1142 = vpop.f32.mrb[0].mxu0
        %v1143 = vadd.f32 %v927, %v1142
        %v1144 = vpop.f32.mrb[0].mxu0
        %v1145 = vadd.f32 %v931, %v1144
        %1146 = vmatprep.mubr.bf16.mxu0 %v879
        %1147 = vmatmul.mubr.bf16.gmra.mrb[0].mxu0 %v878
        %v1148 = vpop.f32.mrb[0].mxu0
        %v1149 = vadd.f32 %v927, %v1148
        %v1150 = vpop.f32.mrb[0].mxu0
        %v1151 = vadd.f32 %v931, %v1150
        %v1152 = vpop.f32.mrb[0].mxu0
        %v1153 = vadd.f32 %v927, %v1152
        %v1154 = vpop.f32.mrb[0].mxu0
        %v1155 = vadd.f32 %v931, %v1154
        %1156 = vmatprep.mubr.bf16.mxu0 %v881
        %1157 = vmatmul.mubr.bf16.gmra.mrb[0].mxu0 %v880
        %v1158 = vpop.f32.mrb[0].mxu0
        %v1159 = vadd.f32 %v927, %v1158
        %v1160 = vpop.f32.mrb[0].mxu0
        %v1161 = vadd.f32 %v931, %v1160
        %v1162 = vpop.f32.mrb[0].mxu0
        %v1163 = vadd.f32 %v927, %v1162
        %v1164 = vpop.f32.mrb[0].mxu0
        %v1165 = vadd.f32 %v931, %v1164
        %1166 = vmatprep.mubr.bf16.mxu0 %v883
        %1167 = vmatmul.mubr.bf16.gmra.mrb[0].mxu0 %v882
        %v1168 = vpop.f32.mrb[0].mxu0
        %v1169 = vadd.f32 %v927, %v1168
        %v1170 = vpop.f32.mrb[0].mxu0
        %v1171 = vadd.f32 %v931, %v1170
        %v1172 = vpop.f32.mrb[0].mxu0
        %v1173 = vadd.f32 %v927, %v1172
        %v1174 = vpop.f32.mrb[0].mxu0
        %v1175 = vadd.f32 %v931, %v1174
        %1176 = vmatprep.mubr.bf16.mxu0 %v885
        %1177 = vmatmul.mubr.bf16.gmra.mrb[0].mxu0 %v884
        %v1178 = vpop.f32.mrb[0].mxu0
        %v1179 = vadd.f32 %v927, %v1178
        %v1180 = vpop.f32.mrb[0].mxu0
        %v1181 = vadd.f32 %v931, %v1180
        %v1182 = vpop.f32.mrb[0].mxu0
        %v1183 = vadd.f32 %v927, %v1182
        %v1184 = vpop.f32.mrb[0].mxu0
        %v1185 = vadd.f32 %v931, %v1184
        %1186 = vmatprep.mubr.bf16.mxu0 %v887
        %1187 = vmatmul.mubr.bf16.gmra.mrb[0].mxu0 %v886
        %v1188 = vpop.f32.mrb[0].mxu0
        %v1189 = vadd.f32 %v927, %v1188
        %v1190 = vpop.f32.mrb[0].mxu0
        %v1191 = vadd.f32 %v931, %v1190
        %v1192 = vpop.f32.mrb[0].mxu0
        %v1193 = vadd.f32 %v927, %v1192
        %v1194 = vpop.f32.mrb[0].mxu0
        %v1195 = vadd.f32 %v931, %v1194
        %1196 = vmatprep.mubr.bf16.mxu0 %v889
        %1197 = vmatmul.mubr.bf16.gmra.mrb[0].mxu0 %v888
        %v1198 = vpop.f32.mrb[0].mxu0
        %v1199 = vadd.f32 %v927, %v1198
        %v1200 = vpop.f32.mrb[0].mxu0
        %v1201 = vadd.f32 %v931, %v1200
        %v1202 = vpop.f32.mrb[0].mxu0
        %v1203 = vadd.f32 %v927, %v1202
        %v1204 = vpop.f32.mrb[0].mxu0
        %v1205 = vadd.f32 %v931, %v1204
        %1206 = vdwg.mxu0
        %v1207 = vmul.f32 %v1131, 0.5
        %v1208 = vmul.f32 %v1135, 0.5
        %v1209 = vmul.f32 %v1141, 0.5
        %v1210 = vmul.f32 %v1145, 0.5
        %v1211 = vmul.f32 %v1151, 0.5
        %v1212 = vmul.f32 %v1155, 0.5
        %v1213 = vmul.f32 %v1161, 0.5
        %v1214 = vmul.f32 %v1165, 0.5
        %v1215 = vmul.f32 %v1171, 0.5
        %v1216 = vmul.f32 %v1175, 0.5
        %v1217 = vmul.f32 %v1181, 0.5
        %v1218 = vmul.f32 %v1185, 0.5
        %v1219 = vmul.f32 %v1191, 0.5
        %v1220 = vmul.f32 %v1195, 0.5
        %v1221 = vmul.f32 %v1201, 0.5
        %v1222 = vmul.f32 %v1205, 0.5
        %v1223 = vmul.f32 %v1207, 1.442695
        %v1224 = vpow.pop %v1223
        %v1225 = vmul.f32 %v1208, 1.442695
        %v1226 = vpow.pop %v1225
        %v1227 = vmul.f32 %v1209, 1.442695
        %v1228 = vpow.pop %v1227
        %v1229 = vmul.f32 %v1210, 1.442695
        %v1230 = vpow.pop %v1229
        %v1231 = vmul.f32 %v1211, 1.442695
        %v1232 = vpow.pop %v1231
        %v1233 = vmul.f32 %v1212, 1.442695
        %v1234 = vpow.pop %v1233
        %v1235 = vmul.f32 %v1213, 1.442695
        %v1236 = vpow.pop %v1235
        %v1237 = vmul.f32 %v1214, 1.442695
        %v1238 = vpow.pop %v1237
        %v1239 = vmul.f32 %v1215, 1.442695
        %v1240 = vpow.pop %v1239
        %v1241 = vmul.f32 %v1216, 1.442695
        %v1242 = vpow.pop %v1241
        %v1243 = vmul.f32 %v1217, 1.442695
        %v1244 = vpow.pop %v1243
        %v1245 = vmul.f32 %v1218, 1.442695
        %v1246 = vpow.pop %v1245
        %v1247 = vmul.f32 %v1219, 1.442695
        %v1248 = vpow.pop %v1247
        %v1249 = vmul.f32 %v1220, 1.442695
        %v1250 = vpow.pop %v1249
        %v1251 = vmul.f32 %v1221, 1.442695
        %v1252 = vpow.pop %v1251
        %v1253 = vmul.f32 %v1222, 1.442695
        %v1254 = vpow.pop %v1253
        %v1255 = vmul.f32 %v509, %v1224
        %v1256 = vmul.f32 %v510, %v1226
        %v1257 = vmul.f32 %v511, %v1228
        %v1258 = vmul.f32 %v512, %v1230
        %v1259 = vmul.f32 %v513, %v1232
        %v1260 = vmul.f32 %v514, %v1234
        %v1261 = vmul.f32 %v515, %v1236
        %v1262 = vmul.f32 %v516, %v1238
        %v1263 = vmul.f32 %v517, %v1240
        %v1264 = vmul.f32 %v518, %v1242
        %v1265 = vmul.f32 %v519, %v1244
        %v1266 = vmul.f32 %v520, %v1246
        %v1267 = vmul.f32 %v521, %v1248
        %v1268 = vmul.f32 %v522, %v1250
        %v1269 = vmul.f32 %v523, %v1252
        %v1270 = vmul.f32 %v524, %v1254
        %v1271 = vadd.f32 %v1129, %v1255
        %v1272 = vadd.f32 %v1133, %v1256
        %v1273 = vadd.f32 %v1139, %v1257
        %v1274 = vadd.f32 %v1143, %v1258
        %v1275 = vadd.f32 %v1149, %v1259
        %v1276 = vadd.f32 %v1153, %v1260
        %v1277 = vadd.f32 %v1159, %v1261
        %v1278 = vadd.f32 %v1163, %v1262
        %v1279 = vadd.f32 %v1169, %v1263
        %v1280 = vadd.f32 %v1173, %v1264
        %v1281 = vadd.f32 %v1179, %v1265
        %v1282 = vadd.f32 %v1183, %v1266
        %v1283 = vadd.f32 %v1189, %v1267
        %v1284 = vadd.f32 %v1193, %v1268
        %v1285 = vadd.f32 %v1199, %v1269
        %v1286 = vadd.f32 %v1203, %v1270
        %v1287 = vpack.c.bf16 %v1272, %v1271
        %v1288 = vpack.c.bf16 %v1274, %v1273
        %v1289 = vpack.c.bf16 %v1276, %v1275
        %v1290 = vpack.c.bf16 %v1278, %v1277
        %v1291 = vpack.c.bf16 %v1280, %v1279
        %v1292 = vpack.c.bf16 %v1282, %v1281
        %v1293 = vpack.c.bf16 %v1284, %v1283
        %v1294 = vpack.c.bf16 %v1286, %v1285
        %v1295 = vld [vmem:[%s6] sm:$0xff]
        %v1296 = vld [vmem:[%s6 + $0x8] sm:$0xff]
        %v1297 = vld [vmem:[%s6 + $0x10] sm:$0xff]
        %v1298 = vld [vmem:[%s6 + $0x18] sm:$0xff]
        %v1299 = vld [vmem:[%s6 + $0x20] sm:$0xff]
        %v1300 = vld [vmem:[%s6 + $0x28] sm:$0xff]
        %v1301 = vld [vmem:[%s6 + $0x30] sm:$0xff]
        %v1302 = vld [vmem:[%s6 + $0x38] sm:$0xff]
        %v1303 = vld [vmem:[%s6 + $0x40] sm:$0xff]
        %v1304 = vld [vmem:[%s6 + $0x48] sm:$0xff]
        %v1305 = vld [vmem:[%s6 + $0x50] sm:$0xff]
        %v1306 = vld [vmem:[%s6 + $0x58] sm:$0xff]
        %v1307 = vld [vmem:[%s6 + $0x60] sm:$0xff]
        %v1308 = vld [vmem:[%s6 + $0x68] sm:$0xff]
        %v1309 = vld [vmem:[%s6 + $0x70] sm:$0xff]
        %v1310 = vld [vmem:[%s6 + $0x78] sm:$0xff]
        %v1311 = vld [vmem:[%s7] sm:$0x3]
        %v1313 = vlaneseq
        %v1314 = vshrl.u32 %v1313, 7
        %v1315 = vsub.s32 0, %v1314
        %v1316 = vrot.slane %v1311, %v1315
        %v1317 = vlaneseq
        %v1318 = vshrl.u32 %v1317, 7
        %v1319 = vsub.s32 1, %v1318
        %v1320 = vrot.slane %v1311, %v1319
        %v1339 = vunpack.c.l.b16 %v1295
        %v1340 = vunpack.c.h.b16 %v1295
        %v1341 = vunpack.c.l.b16 %v1296
        %v1342 = vunpack.c.h.b16 %v1296
        %v1343 = vunpack.c.l.b16 %v1297
        %v1344 = vunpack.c.h.b16 %v1297
        %v1345 = vunpack.c.l.b16 %v1298
        %v1346 = vunpack.c.h.b16 %v1298
        %v1347 = vunpack.c.l.b16 %v1299
        %v1348 = vunpack.c.h.b16 %v1299
        %v1349 = vunpack.c.l.b16 %v1300
        %v1350 = vunpack.c.h.b16 %v1300
        %v1351 = vunpack.c.l.b16 %v1301
        %v1352 = vunpack.c.h.b16 %v1301
        %v1353 = vunpack.c.l.b16 %v1302
        %v1354 = vunpack.c.h.b16 %v1302
        %v1355 = vunpack.c.l.b16 %v1303
        %v1356 = vunpack.c.h.b16 %v1303
        %v1357 = vunpack.c.l.b16 %v1304
        %v1358 = vunpack.c.h.b16 %v1304
        %v1359 = vunpack.c.l.b16 %v1305
        %v1360 = vunpack.c.h.b16 %v1305
        %v1361 = vunpack.c.l.b16 %v1306
        %v1362 = vunpack.c.h.b16 %v1306
        %v1363 = vunpack.c.l.b16 %v1307
        %v1364 = vunpack.c.h.b16 %v1307
        %v1365 = vunpack.c.l.b16 %v1308
        %v1366 = vunpack.c.h.b16 %v1308
        %v1367 = vunpack.c.l.b16 %v1309
        %v1368 = vunpack.c.h.b16 %v1309
        %v1369 = vunpack.c.l.b16 %v1310
        %v1370 = vunpack.c.h.b16 %v1310
        %v1371 = vpack.c.b16 %v1341, %v1339
        %v1372 = vpack.c.b16 %v1342, %v1340
        %v1373 = vpack.c.b16 %v1345, %v1343
        %v1374 = vpack.c.b16 %v1346, %v1344
        %v1375 = vpack.c.b16 %v1349, %v1347
        %v1376 = vpack.c.b16 %v1350, %v1348
        %v1377 = vpack.c.b16 %v1353, %v1351
        %v1378 = vpack.c.b16 %v1354, %v1352
        %v1379 = vpack.c.b16 %v1357, %v1355
        %v1380 = vpack.c.b16 %v1358, %v1356
        %v1381 = vpack.c.b16 %v1361, %v1359
        %v1382 = vpack.c.b16 %v1362, %v1360
        %v1383 = vpack.c.b16 %v1365, %v1363
        %v1384 = vpack.c.b16 %v1366, %v1364
        %v1385 = vpack.c.b16 %v1369, %v1367
        %v1386 = vpack.c.b16 %v1370, %v1368
        %1403 = vmatprep.subr.bf16.mxu0 %v1372
        %1404 = vmatpush1.bf16.msra.mxu0 %v1371
        %1405 = vmatprep.subr.bf16.mxu0 %v1374
        %1406 = vmatpush1.bf16.msra.mxu0 %v1373
        %1407 = vmatprep.subr.bf16.mxu0 %v1376
        %1408 = vmatpush1.bf16.msra.mxu0 %v1375
        %1409 = vmatprep.subr.bf16.mxu0 %v1378
        %1410 = vmatpush1.bf16.msra.mxu0 %v1377
        %1411 = vmatprep.subr.bf16.mxu0 %v1380
        %1412 = vmatpush1.bf16.msra.mxu0 %v1379
        %1413 = vmatprep.subr.bf16.mxu0 %v1382
        %1414 = vmatpush1.bf16.msra.mxu0 %v1381
        %1415 = vmatprep.subr.bf16.mxu0 %v1384
        %1416 = vmatpush1.bf16.msra.mxu0 %v1383
        %1417 = vmatprep.subr.bf16.mxu0 %v1386
        %1418 = vmatpush1.bf16.msra.mxu0 %v1385
        %1419 = vmatprep.subr.bf16.mxu0 0
        %1420 = vmatpush1.bf16.msra.mxu0 0
        %1421 = vmatprep.subr.bf16.mxu0 0
        %1422 = vmatpush1.bf16.msra.mxu0 0
        %1423 = vmatprep.subr.bf16.mxu0 0
        %1424 = vmatpush1.bf16.msra.mxu0 0
        %1425 = vmatprep.subr.bf16.mxu0 0
        %1426 = vmatpush1.bf16.msra.mxu0 0
        %1427 = vmatprep.subr.bf16.mxu0 0
        %1428 = vmatpush1.bf16.msra.mxu0 0
        %1429 = vmatprep.subr.bf16.mxu0 0
        %1430 = vmatpush1.bf16.msra.mxu0 0
        %1431 = vmatprep.subr.bf16.mxu0 0
        %1432 = vmatpush1.bf16.msra.mxu0 0
        %1433 = vmatprep.subr.bf16.mxu0 0
        %1434 = vmatpush1.bf16.msra.mxu0 0
        %1435 = vmatprep.mubr.bf16.mxu0 0
        %1436 = vmatmul.mubr.bf16.gmra.mrb[0].mxu0 %v1287
        %v1437 = vpop.f32.mrb[0].mxu0
        %v1438 = vadd.f32 %v1316, %v1437
        %v1439 = vpop.f32.mrb[0].mxu0
        %v1440 = vadd.f32 %v1320, %v1439
        %v1441 = vpop.f32.mrb[0].mxu0
        %v1442 = vadd.f32 %v1316, %v1441
        %v1443 = vpop.f32.mrb[0].mxu0
        %v1444 = vadd.f32 %v1320, %v1443
        %1445 = vmatprep.mubr.bf16.mxu0 0
        %1446 = vmatmul.mubr.bf16.gmra.mrb[0].mxu0 %v1288
        %v1447 = vpop.f32.mrb[0].mxu0
        %v1448 = vadd.f32 %v1316, %v1447
        %v1449 = vpop.f32.mrb[0].mxu0
        %v1450 = vadd.f32 %v1320, %v1449
        %v1451 = vpop.f32.mrb[0].mxu0
        %v1452 = vadd.f32 %v1316, %v1451
        %v1453 = vpop.f32.mrb[0].mxu0
        %v1454 = vadd.f32 %v1320, %v1453
        %1455 = vmatprep.mubr.bf16.mxu0 0
        %1456 = vmatmul.mubr.bf16.gmra.mrb[0].mxu0 %v1289
        %v1457 = vpop.f32.mrb[0].mxu0
        %v1458 = vadd.f32 %v1316, %v1457
        %v1459 = vpop.f32.mrb[0].mxu0
        %v1460 = vadd.f32 %v1320, %v1459
        %v1461 = vpop.f32.mrb[0].mxu0
        %v1462 = vadd.f32 %v1316, %v1461
        %v1463 = vpop.f32.mrb[0].mxu0
        %v1464 = vadd.f32 %v1320, %v1463
        %1465 = vmatprep.mubr.bf16.mxu0 0
        %1466 = vmatmul.mubr.bf16.gmra.mrb[0].mxu0 %v1290
        %v1467 = vpop.f32.mrb[0].mxu0
        %v1468 = vadd.f32 %v1316, %v1467
        %v1469 = vpop.f32.mrb[0].mxu0
        %v1470 = vadd.f32 %v1320, %v1469
        %v1471 = vpop.f32.mrb[0].mxu0
        %v1472 = vadd.f32 %v1316, %v1471
        %v1473 = vpop.f32.mrb[0].mxu0
        %v1474 = vadd.f32 %v1320, %v1473
        %1475 = vmatprep.mubr.bf16.mxu0 0
        %1476 = vmatmul.mubr.bf16.gmra.mrb[0].mxu0 %v1291
        %v1477 = vpop.f32.mrb[0].mxu0
        %v1478 = vadd.f32 %v1316, %v1477
        %v1479 = vpop.f32.mrb[0].mxu0
        %v1480 = vadd.f32 %v1320, %v1479
        %v1481 = vpop.f32.mrb[0].mxu0
        %v1482 = vadd.f32 %v1316, %v1481
        %v1483 = vpop.f32.mrb[0].mxu0
        %v1484 = vadd.f32 %v1320, %v1483
        %1485 = vmatprep.mubr.bf16.mxu0 0
        %1486 = vmatmul.mubr.bf16.gmra.mrb[0].mxu0 %v1292
        %v1487 = vpop.f32.mrb[0].mxu0
        %v1488 = vadd.f32 %v1316, %v1487
        %v1489 = vpop.f32.mrb[0].mxu0
        %v1490 = vadd.f32 %v1320, %v1489
        %v1491 = vpop.f32.mrb[0].mxu0
        %v1492 = vadd.f32 %v1316, %v1491
        %v1493 = vpop.f32.mrb[0].mxu0
        %v1494 = vadd.f32 %v1320, %v1493
        %1495 = vmatprep.mubr.bf16.mxu0 0
        %1496 = vmatmul.mubr.bf16.gmra.mrb[0].mxu0 %v1293
        %v1497 = vpop.f32.mrb[0].mxu0
        %v1498 = vadd.f32 %v1316, %v1497
        %v1499 = vpop.f32.mrb[0].mxu0
        %v1500 = vadd.f32 %v1320, %v1499
        %v1501 = vpop.f32.mrb[0].mxu0
        %v1502 = vadd.f32 %v1316, %v1501
        %v1503 = vpop.f32.mrb[0].mxu0
        %v1504 = vadd.f32 %v1320, %v1503
        %1505 = vmatprep.mubr.bf16.mxu0 0
        %1506 = vmatmul.mubr.bf16.gmra.mrb[0].mxu0 %v1294
        %v1507 = vpop.f32.mrb[0].mxu0
        %v1508 = vadd.f32 %v1316, %v1507
        %v1509 = vpop.f32.mrb[0].mxu0
        %v1510 = vadd.f32 %v1320, %v1509
        %v1511 = vpop.f32.mrb[0].mxu0
        %v1512 = vadd.f32 %v1316, %v1511
        %v1513 = vpop.f32.mrb[0].mxu0
        %v1514 = vadd.f32 %v1320, %v1513
        %1515 = vdwg.mxu0
        %v1516 = vmax.f32 %v1438, 0.0
        %v1517 = vmax.f32 %v1440, 0.0
        %v1518 = vmax.f32 %v1442, 0.0
        %v1519 = vmax.f32 %v1444, 0.0
        %v1520 = vmax.f32 %v1448, 0.0
        %v1521 = vmax.f32 %v1450, 0.0
        %v1522 = vmax.f32 %v1452, 0.0
        %v1523 = vmax.f32 %v1454, 0.0
        %v1524 = vmax.f32 %v1458, 0.0
        %v1525 = vmax.f32 %v1460, 0.0
        %v1526 = vmax.f32 %v1462, 0.0
        %v1527 = vmax.f32 %v1464, 0.0
        %v1528 = vmax.f32 %v1468, 0.0
        %v1529 = vmax.f32 %v1470, 0.0
        %v1530 = vmax.f32 %v1472, 0.0
        %v1531 = vmax.f32 %v1474, 0.0
        %v1532 = vmax.f32 %v1478, 0.0
        %v1533 = vmax.f32 %v1480, 0.0
        %v1534 = vmax.f32 %v1482, 0.0
        %v1535 = vmax.f32 %v1484, 0.0
        %v1536 = vmax.f32 %v1488, 0.0
        %v1537 = vmax.f32 %v1490, 0.0
        %v1538 = vmax.f32 %v1492, 0.0
        %v1539 = vmax.f32 %v1494, 0.0
        %v1540 = vmax.f32 %v1498, 0.0
        %v1541 = vmax.f32 %v1500, 0.0
        %v1542 = vmax.f32 %v1502, 0.0
        %v1543 = vmax.f32 %v1504, 0.0
        %v1544 = vmax.f32 %v1508, 0.0
        %v1545 = vmax.f32 %v1510, 0.0
        %v1546 = vmax.f32 %v1512, 0.0
        %v1547 = vmax.f32 %v1514, 0.0
        %v1548 = vpack.c.bf16 %v1518, %v1516
        %v1549 = vpack.c.bf16 %v1519, %v1517
        %v1550 = vpack.c.bf16 %v1522, %v1520
        %v1551 = vpack.c.bf16 %v1523, %v1521
        %v1552 = vpack.c.bf16 %v1526, %v1524
        %v1553 = vpack.c.bf16 %v1527, %v1525
        %v1554 = vpack.c.bf16 %v1530, %v1528
        %v1555 = vpack.c.bf16 %v1531, %v1529
        %v1556 = vpack.c.bf16 %v1534, %v1532
        %v1557 = vpack.c.bf16 %v1535, %v1533
        %v1558 = vpack.c.bf16 %v1538, %v1536
        %v1559 = vpack.c.bf16 %v1539, %v1537
        %v1560 = vpack.c.bf16 %v1542, %v1540
        %v1561 = vpack.c.bf16 %v1543, %v1541
        %v1562 = vpack.c.bf16 %v1546, %v1544
        %v1563 = vpack.c.bf16 %v1547, %v1545
        %v1564 = vld [vmem:[%s8] sm:$0xff]
        %v1565 = vld [vmem:[%s8 + $0x8] sm:$0xff]
        %v1566 = vld [vmem:[%s8 + $0x10] sm:$0xff]
        %v1567 = vld [vmem:[%s8 + $0x18] sm:$0xff]
        %v1568 = vld [vmem:[%s8 + $0x20] sm:$0xff]
        %v1569 = vld [vmem:[%s8 + $0x28] sm:$0xff]
        %v1570 = vld [vmem:[%s8 + $0x30] sm:$0xff]
        %v1571 = vld [vmem:[%s8 + $0x38] sm:$0xff]
        %v1572 = vld [vmem:[%s8 + $0x40] sm:$0xff]
        %v1573 = vld [vmem:[%s8 + $0x48] sm:$0xff]
        %v1574 = vld [vmem:[%s8 + $0x50] sm:$0xff]
        %v1575 = vld [vmem:[%s8 + $0x58] sm:$0xff]
        %v1576 = vld [vmem:[%s8 + $0x60] sm:$0xff]
        %v1577 = vld [vmem:[%s8 + $0x68] sm:$0xff]
        %v1578 = vld [vmem:[%s8 + $0x70] sm:$0xff]
        %v1579 = vld [vmem:[%s8 + $0x78] sm:$0xff]
        %v1580 = vld [vmem:[%s8 + $0x80] sm:$0xff]
        %v1581 = vld [vmem:[%s8 + $0x88] sm:$0xff]
        %v1582 = vld [vmem:[%s8 + $0x90] sm:$0xff]
        %v1583 = vld [vmem:[%s8 + $0x98] sm:$0xff]
        %v1584 = vld [vmem:[%s8 + $0xa0] sm:$0xff]
        %v1585 = vld [vmem:[%s8 + $0xa8] sm:$0xff]
        %v1586 = vld [vmem:[%s8 + $0xb0] sm:$0xff]
        %v1587 = vld [vmem:[%s8 + $0xb8] sm:$0xff]
        %v1588 = vld [vmem:[%s8 + $0xc0] sm:$0xff]
        %v1589 = vld [vmem:[%s8 + $0xc8] sm:$0xff]
        %v1590 = vld [vmem:[%s8 + $0xd0] sm:$0xff]
        %v1591 = vld [vmem:[%s8 + $0xd8] sm:$0xff]
        %v1592 = vld [vmem:[%s8 + $0xe0] sm:$0xff]
        %v1593 = vld [vmem:[%s8 + $0xe8] sm:$0xff]
        %v1594 = vld [vmem:[%s8 + $0xf0] sm:$0xff]
        %v1595 = vld [vmem:[%s8 + $0xf8] sm:$0xff]
        %v1596 = vld [vmem:[%s9] sm:$0x3]
        %v1598 = vlaneseq
        %v1599 = vshrl.u32 %v1598, 7
        %v1600 = vsub.s32 0, %v1599
        %v1601 = vrot.slane %v1596, %v1600
        %v1602 = vlaneseq
        %v1603 = vshrl.u32 %v1602, 7
        %v1604 = vsub.s32 1, %v1603
        %v1605 = vrot.slane %v1596, %v1604
        %v1640 = vunpack.c.l.b16 %v1564
        %v1641 = vunpack.c.h.b16 %v1564
        %v1642 = vunpack.c.l.b16 %v1565
        %v1643 = vunpack.c.h.b16 %v1565
        %v1644 = vunpack.c.l.b16 %v1566
        %v1645 = vunpack.c.h.b16 %v1566
        %v1646 = vunpack.c.l.b16 %v1567
        %v1647 = vunpack.c.h.b16 %v1567
        %v1648 = vunpack.c.l.b16 %v1568
        %v1649 = vunpack.c.h.b16 %v1568
        %v1650 = vunpack.c.l.b16 %v1569
        %v1651 = vunpack.c.h.b16 %v1569
        %v1652 = vunpack.c.l.b16 %v1570
        %v1653 = vunpack.c.h.b16 %v1570
        %v1654 = vunpack.c.l.b16 %v1571
        %v1655 = vunpack.c.h.b16 %v1571
        %v1656 = vunpack.c.l.b16 %v1572
        %v1657 = vunpack.c.h.b16 %v1572
        %v1658 = vunpack.c.l.b16 %v1573
        %v1659 = vunpack.c.h.b16 %v1573
        %v1660 = vunpack.c.l.b16 %v1574
        %v1661 = vunpack.c.h.b16 %v1574
        %v1662 = vunpack.c.l.b16 %v1575
        %v1663 = vunpack.c.h.b16 %v1575
        %v1664 = vunpack.c.l.b16 %v1576
        %v1665 = vunpack.c.h.b16 %v1576
        %v1666 = vunpack.c.l.b16 %v1577
        %v1667 = vunpack.c.h.b16 %v1577
        %v1668 = vunpack.c.l.b16 %v1578
        %v1669 = vunpack.c.h.b16 %v1578
        %v1670 = vunpack.c.l.b16 %v1579
        %v1671 = vunpack.c.h.b16 %v1579
        %v1672 = vunpack.c.l.b16 %v1580
        %v1673 = vunpack.c.h.b16 %v1580
        %v1674 = vunpack.c.l.b16 %v1581
        %v1675 = vunpack.c.h.b16 %v1581
        %v1676 = vunpack.c.l.b16 %v1582
        %v1677 = vunpack.c.h.b16 %v1582
        %v1678 = vunpack.c.l.b16 %v1583
        %v1679 = vunpack.c.h.b16 %v1583
        %v1680 = vunpack.c.l.b16 %v1584
        %v1681 = vunpack.c.h.b16 %v1584
        %v1682 = vunpack.c.l.b16 %v1585
        %v1683 = vunpack.c.h.b16 %v1585
        %v1684 = vunpack.c.l.b16 %v1586
        %v1685 = vunpack.c.h.b16 %v1586
        %v1686 = vunpack.c.l.b16 %v1587
        %v1687 = vunpack.c.h.b16 %v1587
        %v1688 = vunpack.c.l.b16 %v1588
        %v1689 = vunpack.c.h.b16 %v1588
        %v1690 = vunpack.c.l.b16 %v1589
        %v1691 = vunpack.c.h.b16 %v1589
        %v1692 = vunpack.c.l.b16 %v1590
        %v1693 = vunpack.c.h.b16 %v1590
        %v1694 = vunpack.c.l.b16 %v1591
        %v1695 = vunpack.c.h.b16 %v1591
        %v1696 = vunpack.c.l.b16 %v1592
        %v1697 = vunpack.c.h.b16 %v1592
        %v1698 = vunpack.c.l.b16 %v1593
        %v1699 = vunpack.c.h.b16 %v1593
        %v1700 = vunpack.c.l.b16 %v1594
        %v1701 = vunpack.c.h.b16 %v1594
        %v1702 = vunpack.c.l.b16 %v1595
        %v1703 = vunpack.c.h.b16 %v1595
        %v1704 = vpack.c.b16 %v1642, %v1640
        %v1705 = vpack.c.b16 %v1643, %v1641
        %v1706 = vpack.c.b16 %v1646, %v1644
        %v1707 = vpack.c.b16 %v1647, %v1645
        %v1708 = vpack.c.b16 %v1650, %v1648
        %v1709 = vpack.c.b16 %v1651, %v1649
        %v1710 = vpack.c.b16 %v1654, %v1652
        %v1711 = vpack.c.b16 %v1655, %v1653
        %v1712 = vpack.c.b16 %v1658, %v1656
        %v1713 = vpack.c.b16 %v1659, %v1657
        %v1714 = vpack.c.b16 %v1662, %v1660
        %v1715 = vpack.c.b16 %v1663, %v1661
        %v1716 = vpack.c.b16 %v1666, %v1664
        %v1717 = vpack.c.b16 %v1667, %v1665
        %v1718 = vpack.c.b16 %v1670, %v1668
        %v1719 = vpack.c.b16 %v1671, %v1669
        %v1720 = vpack.c.b16 %v1674, %v1672
        %v1721 = vpack.c.b16 %v1675, %v1673
        %v1722 = vpack.c.b16 %v1678, %v1676
        %v1723 = vpack.c.b16 %v1679, %v1677
        %v1724 = vpack.c.b16 %v1682, %v1680
        %v1725 = vpack.c.b16 %v1683, %v1681
        %v1726 = vpack.c.b16 %v1686, %v1684
        %v1727 = vpack.c.b16 %v1687, %v1685
        %v1728 = vpack.c.b16 %v1690, %v1688
        %v1729 = vpack.c.b16 %v1691, %v1689
        %v1730 = vpack.c.b16 %v1694, %v1692
        %v1731 = vpack.c.b16 %v1695, %v1693
        %v1732 = vpack.c.b16 %v1698, %v1696
        %v1733 = vpack.c.b16 %v1699, %v1697
        %v1734 = vpack.c.b16 %v1702, %v1700
        %v1735 = vpack.c.b16 %v1703, %v1701
        %1768 = vmatprep.subr.bf16.mxu0 %v1705
        %1769 = vmatpush1.bf16.msra.mxu0 %v1704
        %1770 = vmatprep.subr.bf16.mxu0 %v1707
        %1771 = vmatpush1.bf16.msra.mxu0 %v1706
        %1772 = vmatprep.subr.bf16.mxu0 %v1709
        %1773 = vmatpush1.bf16.msra.mxu0 %v1708
        %1774 = vmatprep.subr.bf16.mxu0 %v1711
        %1775 = vmatpush1.bf16.msra.mxu0 %v1710
        %1776 = vmatprep.subr.bf16.mxu0 %v1713
        %1777 = vmatpush1.bf16.msra.mxu0 %v1712
        %1778 = vmatprep.subr.bf16.mxu0 %v1715
        %1779 = vmatpush1.bf16.msra.mxu0 %v1714
        %1780 = vmatprep.subr.bf16.mxu0 %v1717
        %1781 = vmatpush1.bf16.msra.mxu0 %v1716
        %1782 = vmatprep.subr.bf16.mxu0 %v1719
        %1783 = vmatpush1.bf16.msra.mxu0 %v1718
        %1784 = vmatprep.subr.bf16.mxu0 %v1721
        %1785 = vmatpush1.bf16.msra.mxu0 %v1720
        %1786 = vmatprep.subr.bf16.mxu0 %v1723
        %1787 = vmatpush1.bf16.msra.mxu0 %v1722
        %1788 = vmatprep.subr.bf16.mxu0 %v1725
        %1789 = vmatpush1.bf16.msra.mxu0 %v1724
        %1790 = vmatprep.subr.bf16.mxu0 %v1727
        %1791 = vmatpush1.bf16.msra.mxu0 %v1726
        %1792 = vmatprep.subr.bf16.mxu0 %v1729
        %1793 = vmatpush1.bf16.msra.mxu0 %v1728
        %1794 = vmatprep.subr.bf16.mxu0 %v1731
        %1795 = vmatpush1.bf16.msra.mxu0 %v1730
        %1796 = vmatprep.subr.bf16.mxu0 %v1733
        %1797 = vmatpush1.bf16.msra.mxu0 %v1732
        %1798 = vmatprep.subr.bf16.mxu0 %v1735
        %1799 = vmatpush1.bf16.msra.mxu0 %v1734
        %1800 = vmatprep.mubr.bf16.mxu0 %v1549
        %1801 = vmatmul.mubr.bf16.gmra.mrb[0].mxu0 %v1548
        %v1802 = vpop.f32.mrb[0].mxu0
        %v1803 = vadd.f32 %v1601, %v1802
        %v1804 = vpop.f32.mrb[0].mxu0
        %v1805 = vadd.f32 %v1605, %v1804
        %v1806 = vpop.f32.mrb[0].mxu0
        %v1807 = vadd.f32 %v1601, %v1806
        %v1808 = vpop.f32.mrb[0].mxu0
        %v1809 = vadd.f32 %v1605, %v1808
        %1810 = vmatprep.mubr.bf16.mxu0 %v1551
        %1811 = vmatmul.mubr.bf16.gmra.mrb[0].mxu0 %v1550
        %v1812 = vpop.f32.mrb[0].mxu0
        %v1813 = vadd.f32 %v1601, %v1812
        %v1814 = vpop.f32.mrb[0].mxu0
        %v1815 = vadd.f32 %v1605, %v1814
        %v1816 = vpop.f32.mrb[0].mxu0
        %v1817 = vadd.f32 %v1601, %v1816
        %v1818 = vpop.f32.mrb[0].mxu0
        %v1819 = vadd.f32 %v1605, %v1818
        %1820 = vmatprep.mubr.bf16.mxu0 %v1553
        %1821 = vmatmul.mubr.bf16.gmra.mrb[0].mxu0 %v1552
        %v1822 = vpop.f32.mrb[0].mxu0
        %v1823 = vadd.f32 %v1601, %v1822
        %v1824 = vpop.f32.mrb[0].mxu0
        %v1825 = vadd.f32 %v1605, %v1824
        %v1826 = vpop.f32.mrb[0].mxu0
        %v1827 = vadd.f32 %v1601, %v1826
        %v1828 = vpop.f32.mrb[0].mxu0
        %v1829 = vadd.f32 %v1605, %v1828
        %1830 = vmatprep.mubr.bf16.mxu0 %v1555
        %1831 = vmatmul.mubr.bf16.gmra.mrb[0].mxu0 %v1554
        %v1832 = vpop.f32.mrb[0].mxu0
        %v1833 = vadd.f32 %v1601, %v1832
        %v1834 = vpop.f32.mrb[0].mxu0
        %v1835 = vadd.f32 %v1605, %v1834
        %v1836 = vpop.f32.mrb[0].mxu0
        %v1837 = vadd.f32 %v1601, %v1836
        %v1838 = vpop.f32.mrb[0].mxu0
        %v1839 = vadd.f32 %v1605, %v1838
        %1840 = vmatprep.mubr.bf16.mxu0 %v1557
        %1841 = vmatmul.mubr.bf16.gmra.mrb[0].mxu0 %v1556
        %v1842 = vpop.f32.mrb[0].mxu0
        %v1843 = vadd.f32 %v1601, %v1842
        %v1844 = vpop.f32.mrb[0].mxu0
        %v1845 = vadd.f32 %v1605, %v1844
        %v1846 = vpop.f32.mrb[0].mxu0
        %v1847 = vadd.f32 %v1601, %v1846
        %v1848 = vpop.f32.mrb[0].mxu0
        %v1849 = vadd.f32 %v1605, %v1848
        %1850 = vmatprep.mubr.bf16.mxu0 %v1559
        %1851 = vmatmul.mubr.bf16.gmra.mrb[0].mxu0 %v1558
        %v1852 = vpop.f32.mrb[0].mxu0
        %v1853 = vadd.f32 %v1601, %v1852
        %v1854 = vpop.f32.mrb[0].mxu0
        %v1855 = vadd.f32 %v1605, %v1854
        %v1856 = vpop.f32.mrb[0].mxu0
        %v1857 = vadd.f32 %v1601, %v1856
        %v1858 = vpop.f32.mrb[0].mxu0
        %v1859 = vadd.f32 %v1605, %v1858
        %1860 = vmatprep.mubr.bf16.mxu0 %v1561
        %1861 = vmatmul.mubr.bf16.gmra.mrb[0].mxu0 %v1560
        %v1862 = vpop.f32.mrb[0].mxu0
        %v1863 = vadd.f32 %v1601, %v1862
        %v1864 = vpop.f32.mrb[0].mxu0
        %v1865 = vadd.f32 %v1605, %v1864
        %v1866 = vpop.f32.mrb[0].mxu0
        %v1867 = vadd.f32 %v1601, %v1866
        %v1868 = vpop.f32.mrb[0].mxu0
        %v1869 = vadd.f32 %v1605, %v1868
        %1870 = vmatprep.mubr.bf16.mxu0 %v1563
        %1871 = vmatmul.mubr.bf16.gmra.mrb[0].mxu0 %v1562
        %v1872 = vpop.f32.mrb[0].mxu0
        %v1873 = vadd.f32 %v1601, %v1872
        %v1874 = vpop.f32.mrb[0].mxu0
        %v1875 = vadd.f32 %v1605, %v1874
        %v1876 = vpop.f32.mrb[0].mxu0
        %v1877 = vadd.f32 %v1601, %v1876
        %v1878 = vpop.f32.mrb[0].mxu0
        %v1879 = vadd.f32 %v1605, %v1878
        %1880 = vdwg.mxu0
        %v1881 = vxor.u32 %v1803, 2147483648
        %v1882 = vxor.u32 %v1805, 2147483648
        %v1883 = vxor.u32 %v1807, 2147483648
        %v1884 = vxor.u32 %v1809, 2147483648
        %v1885 = vxor.u32 %v1813, 2147483648
        %v1886 = vxor.u32 %v1815, 2147483648
        %v1887 = vxor.u32 %v1817, 2147483648
        %v1888 = vxor.u32 %v1819, 2147483648
        %v1889 = vxor.u32 %v1823, 2147483648
        %v1890 = vxor.u32 %v1825, 2147483648
        %v1891 = vxor.u32 %v1827, 2147483648
        %v1892 = vxor.u32 %v1829, 2147483648
        %v1893 = vxor.u32 %v1833, 2147483648
        %v1894 = vxor.u32 %v1835, 2147483648
        %v1895 = vxor.u32 %v1837, 2147483648
        %v1896 = vxor.u32 %v1839, 2147483648
        %v1897 = vxor.u32 %v1843, 2147483648
        %v1898 = vxor.u32 %v1845, 2147483648
        %v1899 = vxor.u32 %v1847, 2147483648
        %v1900 = vxor.u32 %v1849, 2147483648
        %v1901 = vxor.u32 %v1853, 2147483648
        %v1902 = vxor.u32 %v1855, 2147483648
        %v1903 = vxor.u32 %v1857, 2147483648
        %v1904 = vxor.u32 %v1859, 2147483648
        %v1905 = vxor.u32 %v1863, 2147483648
        %v1906 = vxor.u32 %v1865, 2147483648
        %v1907 = vxor.u32 %v1867, 2147483648
        %v1908 = vxor.u32 %v1869, 2147483648
        %v1909 = vxor.u32 %v1873, 2147483648
        %v1910 = vxor.u32 %v1875, 2147483648
        %v1911 = vxor.u32 %v1877, 2147483648
        %v1912 = vxor.u32 %v1879, 2147483648
        %v1913 = vmul.f32 %v1881, 1.442695
        %v1914 = vpow.pop %v1913
        %v1915 = vmul.f32 %v1882, 1.442695
        %v1916 = vpow.pop %v1915
        %v1917 = vmul.f32 %v1883, 1.442695
        %v1918 = vpow.pop %v1917
        %v1919 = vmul.f32 %v1884, 1.442695
        %v1920 = vpow.pop %v1919
        %v1921 = vmul.f32 %v1885, 1.442695
        %v1922 = vpow.pop %v1921
        %v1923 = vmul.f32 %v1886, 1.442695
        %v1924 = vpow.pop %v1923
        %v1925 = vmul.f32 %v1887, 1.442695
        %v1926 = vpow.pop %v1925
        %v1927 = vmul.f32 %v1888, 1.442695
        %v1928 = vpow.pop %v1927
        %v1929 = vmul.f32 %v1889, 1.442695
        %v1930 = vpow.pop %v1929
        %v1931 = vmul.f32 %v1890, 1.442695
        %v1932 = vpow.pop %v1931
        %v1933 = vmul.f32 %v1891, 1.442695
        %v1934 = vpow.pop %v1933
        %v1935 = vmul.f32 %v1892, 1.442695
        %v1936 = vpow.pop %v1935
        %v1937 = vmul.f32 %v1893, 1.442695
        %v1938 = vpow.pop %v1937
        %v1939 = vmul.f32 %v1894, 1.442695
        %v1940 = vpow.pop %v1939
        %v1941 = vmul.f32 %v1895, 1.442695
        %v1942 = vpow.pop %v1941
        %v1943 = vmul.f32 %v1896, 1.442695
        %v1944 = vpow.pop %v1943
        %v1945 = vmul.f32 %v1897, 1.442695
        %v1946 = vpow.pop %v1945
        %v1947 = vmul.f32 %v1898, 1.442695
        %v1948 = vpow.pop %v1947
        %v1949 = vmul.f32 %v1899, 1.442695
        %v1950 = vpow.pop %v1949
        %v1951 = vmul.f32 %v1900, 1.442695
        %v1952 = vpow.pop %v1951
        %v1953 = vmul.f32 %v1901, 1.442695
        %v1954 = vpow.pop %v1953
        %v1955 = vmul.f32 %v1902, 1.442695
        %v1956 = vpow.pop %v1955
        %v1957 = vmul.f32 %v1903, 1.442695
        %v1958 = vpow.pop %v1957
        %v1959 = vmul.f32 %v1904, 1.442695
        %v1960 = vpow.pop %v1959
        %v1961 = vmul.f32 %v1905, 1.442695
        %v1962 = vpow.pop %v1961
        %v1963 = vmul.f32 %v1906, 1.442695
        %v1964 = vpow.pop %v1963
        %v1965 = vmul.f32 %v1907, 1.442695
        %v1966 = vpow.pop %v1965
        %v1967 = vmul.f32 %v1908, 1.442695
        %v1968 = vpow.pop %v1967
        %v1969 = vmul.f32 %v1909, 1.442695
        %v1970 = vpow.pop %v1969
        %v1971 = vmul.f32 %v1910, 1.442695
        %v1972 = vpow.pop %v1971
        %v1973 = vmul.f32 %v1911, 1.442695
        %v1974 = vpow.pop %v1973
        %v1975 = vmul.f32 %v1912, 1.442695
        %v1976 = vpow.pop %v1975
        %v1977 = vadd.f32 %v1914, 1.0
        %v1978 = vadd.f32 %v1916, 1.0
        %v1979 = vadd.f32 %v1918, 1.0
        %v1980 = vadd.f32 %v1920, 1.0
        %v1981 = vadd.f32 %v1922, 1.0
        %v1982 = vadd.f32 %v1924, 1.0
        %v1983 = vadd.f32 %v1926, 1.0
        %v1984 = vadd.f32 %v1928, 1.0
        %v1985 = vadd.f32 %v1930, 1.0
        %v1986 = vadd.f32 %v1932, 1.0
        %v1987 = vadd.f32 %v1934, 1.0
        %v1988 = vadd.f32 %v1936, 1.0
        %v1989 = vadd.f32 %v1938, 1.0
        %v1990 = vadd.f32 %v1940, 1.0
        %v1991 = vadd.f32 %v1942, 1.0
        %v1992 = vadd.f32 %v1944, 1.0
        %v1993 = vadd.f32 %v1946, 1.0
        %v1994 = vadd.f32 %v1948, 1.0
        %v1995 = vadd.f32 %v1950, 1.0
        %v1996 = vadd.f32 %v1952, 1.0
        %v1997 = vadd.f32 %v1954, 1.0
        %v1998 = vadd.f32 %v1956, 1.0
        %v1999 = vadd.f32 %v1958, 1.0
        %v2000 = vadd.f32 %v1960, 1.0
        %v2001 = vadd.f32 %v1962, 1.0
        %v2002 = vadd.f32 %v1964, 1.0
        %v2003 = vadd.f32 %v1966, 1.0
        %v2004 = vadd.f32 %v1968, 1.0
        %v2005 = vadd.f32 %v1970, 1.0
        %v2006 = vadd.f32 %v1972, 1.0
        %v2007 = vadd.f32 %v1974, 1.0
        %v2008 = vadd.f32 %v1976, 1.0
        %v2009 = vrcp.pop %v1977
        %v2010 = vmul.f32 1.0, %v2009
        %v2011 = vrcp.pop %v1978
        %v2012 = vmul.f32 1.0, %v2011
        %v2013 = vrcp.pop %v1979
        %v2014 = vmul.f32 1.0, %v2013
        %v2015 = vrcp.pop %v1980
        %v2016 = vmul.f32 1.0, %v2015
        %v2017 = vrcp.pop %v1981
        %v2018 = vmul.f32 1.0, %v2017
        %v2019 = vrcp.pop %v1982
        %v2020 = vmul.f32 1.0, %v2019
        %v2021 = vrcp.pop %v1983
        %v2022 = vmul.f32 1.0, %v2021
        %v2023 = vrcp.pop %v1984
        %v2024 = vmul.f32 1.0, %v2023
        %v2025 = vrcp.pop %v1985
        %v2026 = vmul.f32 1.0, %v2025
        %v2027 = vrcp.pop %v1986
        %v2028 = vmul.f32 1.0, %v2027
        %v2029 = vrcp.pop %v1987
        %v2030 = vmul.f32 1.0, %v2029
        %v2031 = vrcp.pop %v1988
        %v2032 = vmul.f32 1.0, %v2031
        %v2033 = vrcp.pop %v1989
        %v2034 = vmul.f32 1.0, %v2033
        %v2035 = vrcp.pop %v1990
        %v2036 = vmul.f32 1.0, %v2035
        %v2037 = vrcp.pop %v1991
        %v2038 = vmul.f32 1.0, %v2037
        %v2039 = vrcp.pop %v1992
        %v2040 = vmul.f32 1.0, %v2039
        %v2041 = vrcp.pop %v1993
        %v2042 = vmul.f32 1.0, %v2041
        %v2043 = vrcp.pop %v1994
        %v2044 = vmul.f32 1.0, %v2043
        %v2045 = vrcp.pop %v1995
        %v2046 = vmul.f32 1.0, %v2045
        %v2047 = vrcp.pop %v1996
        %v2048 = vmul.f32 1.0, %v2047
        %v2049 = vrcp.pop %v1997
        %v2050 = vmul.f32 1.0, %v2049
        %v2051 = vrcp.pop %v1998
        %v2052 = vmul.f32 1.0, %v2051
        %v2053 = vrcp.pop %v1999
        %v2054 = vmul.f32 1.0, %v2053
        %v2055 = vrcp.pop %v2000
        %v2056 = vmul.f32 1.0, %v2055
        %v2057 = vrcp.pop %v2001
        %v2058 = vmul.f32 1.0, %v2057
        %v2059 = vrcp.pop %v2002
        %v2060 = vmul.f32 1.0, %v2059
        %v2061 = vrcp.pop %v2003
        %v2062 = vmul.f32 1.0, %v2061
        %v2063 = vrcp.pop %v2004
        %v2064 = vmul.f32 1.0, %v2063
        %v2065 = vrcp.pop %v2005
        %v2066 = vmul.f32 1.0, %v2065
        %v2067 = vrcp.pop %v2006
        %v2068 = vmul.f32 1.0, %v2067
        %v2069 = vrcp.pop %v2007
        %v2070 = vmul.f32 1.0, %v2069
        %v2071 = vrcp.pop %v2008
        %v2072 = vmul.f32 1.0, %v2071
        %2073 = vst [vmem:[%s429] sm:$0xff] %v2010
        %2074 = vst [vmem:[%s429 + $0x8] sm:$0xff] %v2012
        %2075 = vst [vmem:[%s429 + $0x10] sm:$0xff] %v2014
        %2076 = vst [vmem:[%s429 + $0x18] sm:$0xff] %v2016
        %2077 = vst [vmem:[%s429 + $0x20] sm:$0xff] %v2018
        %2078 = vst [vmem:[%s429 + $0x28] sm:$0xff] %v2020
        %2079 = vst [vmem:[%s429 + $0x30] sm:$0xff] %v2022
        %2080 = vst [vmem:[%s429 + $0x38] sm:$0xff] %v2024
        %2081 = vst [vmem:[%s429 + $0x40] sm:$0xff] %v2026
        %2082 = vst [vmem:[%s429 + $0x48] sm:$0xff] %v2028
        %2083 = vst [vmem:[%s429 + $0x50] sm:$0xff] %v2030
        %2084 = vst [vmem:[%s429 + $0x58] sm:$0xff] %v2032
        %2085 = vst [vmem:[%s429 + $0x60] sm:$0xff] %v2034
        %2086 = vst [vmem:[%s429 + $0x68] sm:$0xff] %v2036
        %2087 = vst [vmem:[%s429 + $0x70] sm:$0xff] %v2038
        %2088 = vst [vmem:[%s429 + $0x78] sm:$0xff] %v2040
        %2089 = vst [vmem:[%s429 + $0x80] sm:$0xff] %v2042
        %2090 = vst [vmem:[%s429 + $0x88] sm:$0xff] %v2044
        %2091 = vst [vmem:[%s429 + $0x90] sm:$0xff] %v2046
        %2092 = vst [vmem:[%s429 + $0x98] sm:$0xff] %v2048
        %2093 = vst [vmem:[%s429 + $0xa0] sm:$0xff] %v2050
        %2094 = vst [vmem:[%s429 + $0xa8] sm:$0xff] %v2052
        %2095 = vst [vmem:[%s429 + $0xb0] sm:$0xff] %v2054
        %2096 = vst [vmem:[%s429 + $0xb8] sm:$0xff] %v2056
        %2097 = vst [vmem:[%s429 + $0xc0] sm:$0xff] %v2058
        %2098 = vst [vmem:[%s429 + $0xc8] sm:$0xff] %v2060
        %2099 = vst [vmem:[%s429 + $0xd0] sm:$0xff] %v2062
        %2100 = vst [vmem:[%s429 + $0xd8] sm:$0xff] %v2064
        %2101 = vst [vmem:[%s429 + $0xe0] sm:$0xff] %v2066
        %2102 = vst [vmem:[%s429 + $0xe8] sm:$0xff] %v2068
        %2103 = vst [vmem:[%s429 + $0xf0] sm:$0xff] %v2070
        %2104 = vst [vmem:[%s429 + $0xf8] sm:$0xff] %v2072
        %2105 = vst [vmem:[%s436] sm:$0xff] %v1129
        %2106 = vst [vmem:[%s436 + $0x8] sm:$0xff] %v1133
        %2107 = vst [vmem:[%s436 + $0x10] sm:$0xff] %v1139
        %2108 = vst [vmem:[%s436 + $0x18] sm:$0xff] %v1143
        %2109 = vst [vmem:[%s436 + $0x20] sm:$0xff] %v1149
        %2110 = vst [vmem:[%s436 + $0x28] sm:$0xff] %v1153
        %2111 = vst [vmem:[%s436 + $0x30] sm:$0xff] %v1159
        %2112 = vst [vmem:[%s436 + $0x38] sm:$0xff] %v1163
        %2113 = vst [vmem:[%s436 + $0x40] sm:$0xff] %v1169
        %2114 = vst [vmem:[%s436 + $0x48] sm:$0xff] %v1173
        %2115 = vst [vmem:[%s436 + $0x50] sm:$0xff] %v1179
        %2116 = vst [vmem:[%s436 + $0x58] sm:$0xff] %v1183
        %2117 = vst [vmem:[%s436 + $0x60] sm:$0xff] %v1189
        %2118 = vst [vmem:[%s436 + $0x68] sm:$0xff] %v1193
        %2119 = vst [vmem:[%s436 + $0x70] sm:$0xff] %v1199
        %2120 = vst [vmem:[%s436 + $0x78] sm:$0xff] %v1203
        %2121 = vst [vmem:[%s443] sm:$0xff] %v1131
        %2122 = vst [vmem:[%s443 + $0x8] sm:$0xff] %v1135
        %2123 = vst [vmem:[%s443 + $0x10] sm:$0xff] %v1141
        %2124 = vst [vmem:[%s443 + $0x18] sm:$0xff] %v1145
        %2125 = vst [vmem:[%s443 + $0x20] sm:$0xff] %v1151
        %2126 = vst [vmem:[%s443 + $0x28] sm:$0xff] %v1155
        %2127 = vst [vmem:[%s443 + $0x30] sm:$0xff] %v1161
        %2128 = vst [vmem:[%s443 + $0x38] sm:$0xff] %v1165
        %2129 = vst [vmem:[%s443 + $0x40] sm:$0xff] %v1171
        %2130 = vst [vmem:[%s443 + $0x48] sm:$0xff] %v1175
        %2131 = vst [vmem:[%s443 + $0x50] sm:$0xff] %v1181
        %2132 = vst [vmem:[%s443 + $0x58] sm:$0xff] %v1185
        %2133 = vst [vmem:[%s443 + $0x60] sm:$0xff] %v1191
        %2134 = vst [vmem:[%s443 + $0x68] sm:$0xff] %v1195
        %2135 = vst [vmem:[%s443 + $0x70] sm:$0xff] %v1201
        %2136 = vst [vmem:[%s443 + $0x78] sm:$0xff] %v1205
        %s2137 = sand.u32 %s258, 1
        %s2138 = scalar_lea.sflag [#allocation3], %s2137
        %s2139 = sand.u32 %s258, 1
        %s2140 = smul.addr %s2139, 256
        %s2141 = scalar_lea.vmem [#allocation2], %s2140
        %s2142 = sand.u32 %s30, 1
        %s2143 = scalar_lea.sflag [#allocation5], %s2142
        %s2144 = sand.u32 %s284, 1
        %s2145 = smul.addr %s2144, 128
        %s2146 = scalar_lea.vmem [#allocation4], %s2145
        %s2147 = sand.u32 %s30, 1
        %s2148 = scalar_lea.sflag [#allocation5], %s2147
        %s2149 = sand.u32 %s310, 1
        %s2150 = smul.addr %s2149, 128
        %s2151 = scalar_lea.vmem [#allocation6], %s2150
        // Predicated region
        $region61: #{vae_forward.1} parent=59 // pred_check
          %p2152 = pneg %p268
        $region62: #{vae_forward.1} parent=59 // pred_check_branch
          %2154 = sbr.rel (%p2152) target = $region64
        $region63: #{vae_forward.1} parent=59 // pred_region
          %s2155 = smul.u32 16, %s30
          %s2157 = ssub.s32 4096, 4096
          %2158 = vsyncadd %s2138, %s2157
          %s2159 = smul.addr %s2155, 2
          %s2160 = smul.addr %s2159, 128
          %s2161 = scalar_lea.hbm %s10, %s2160
          %s2162 = sshll.u32 %s2141, 4
          %s2163 = int_to_ptr.vmem [resolvable:$true] %s2162
          %2168 = dma.vmem_to_hbm [thread:$0]  %s2163, 4096, %s2161, %s2138, 256, 256, 16
        $region64: #{vae_forward.1} parent=59 // pred_fallthru
          _
        // Predicated region
        $region65: #{vae_forward.1} parent=59 // pred_check
          %p2169 = pneg %p294
        $region66: #{vae_forward.1} parent=59 // pred_check_branch
          %2171 = sbr.rel (%p2169) target = $region68
        $region67: #{vae_forward.1} parent=59 // pred_region
          %s2172 = smul.u32 16, %s30
          %s2174 = ssub.s32 2048, 2048
          %2175 = vsyncadd %s2143, %s2174
          %s2176 = smul.addr %s2172, 128
          %s2177 = scalar_lea.hbm %s11, %s2176
          %s2178 = sshll.u32 %s2146, 4
          %s2179 = int_to_ptr.vmem [resolvable:$true] %s2178
          %2184 = dma.vmem_to_hbm [thread:$0]  %s2179, 2048, %s2177, %s2143, 128, 128, 8
        $region68: #{vae_forward.1} parent=59 // pred_fallthru
          _
        // Predicated region
        $region69: #{vae_forward.1} parent=59 // pred_check
          %p2185 = pneg %p320
        $region70: #{vae_forward.1} parent=59 // pred_check_branch
          %2187 = sbr.rel (%p2185) target = $region72
        $region71: #{vae_forward.1} parent=59 // pred_region
          %s2188 = smul.u32 16, %s30
          %s2190 = ssub.s32 2048, 2048
          %2191 = vsyncadd %s2148, %s2190
          %s2192 = smul.addr %s2188, 128
          %s2193 = scalar_lea.hbm %s12, %s2192
          %s2194 = sshll.u32 %s2151, 4
          %s2195 = int_to_ptr.vmem [resolvable:$true] %s2194
          %2200 = dma.vmem_to_hbm [thread:$0]  %s2195, 2048, %s2193, %s2148, 128, 128, 8
        $region72: #{vae_forward.1} parent=59 // pred_fallthru
          _
      $region60: #{vae_forward.1} parent=5 // pred_fallthru
        _
      %p2201 = scmp.le.s32.totalorder 2, %s25
      // Predicated region
      $region73: #{vae_forward.1} parent=5 // pred_check
        %p2202 = pneg %p2201
      $region74: #{vae_forward.1} parent=5 // pred_check_branch
        %2204 = sbr.rel (%p2202) target = $region76
      $region75: #{vae_forward.1} parent=5 // pred_region
        %s2205 = ssub.s32 %s25, 2
        // Predicated region
        $region77: #{vae_forward.1} parent=75 // pred_check
          %p2206 = pneg %p274
        $region78: #{vae_forward.1} parent=75 // pred_check_branch
          %2208 = sbr.rel (%p2206) target = $region80
        $region79: #{vae_forward.1} parent=75 // pred_region
          %s2209 = sand.u32 %s259, 1
          %s2210 = scalar_lea.sflag [#allocation3], %s2209
          %s2211 = sand.u32 %s259, 1
          %s2212 = smul.addr %s2211, 256
          %s2213 = scalar_lea.vmem [#allocation2], %s2212
          %2214 = dma.done %s2210, 4096
        $region80: #{vae_forward.1} parent=75 // pred_fallthru
          _
        // Predicated region
        $region81: #{vae_forward.1} parent=75 // pred_check
          %p2215 = pneg %p300
        $region82: #{vae_forward.1} parent=75 // pred_check_branch
          %2217 = sbr.rel (%p2215) target = $region84
        $region83: #{vae_forward.1} parent=75 // pred_region
          %s2218 = sand.u32 %s31, 1
          %s2219 = scalar_lea.sflag [#allocation5], %s2218
          %s2220 = sand.u32 %s285, 1
          %s2221 = smul.addr %s2220, 128
          %s2222 = scalar_lea.vmem [#allocation4], %s2221
          %2223 = dma.done %s2219, 2048
        $region84: #{vae_forward.1} parent=75 // pred_fallthru
          _
        // Predicated region
        $region85: #{vae_forward.1} parent=75 // pred_check
          %p2224 = pneg %p326
        $region86: #{vae_forward.1} parent=75 // pred_check_branch
          %2226 = sbr.rel (%p2224) target = $region88
        $region87: #{vae_forward.1} parent=75 // pred_region
          %s2227 = sand.u32 %s31, 1
          %s2228 = scalar_lea.sflag [#allocation5], %s2227
          %s2229 = sand.u32 %s311, 1
          %s2230 = smul.addr %s2229, 128
          %s2231 = scalar_lea.vmem [#allocation6], %s2230
          %2232 = dma.done %s2228, 2048
        $region88: #{vae_forward.1} parent=75 // pred_fallthru
          _
      $region76: #{vae_forward.1} parent=5 // pred_fallthru
        _
    $region6: #{vae_forward.1} parent=1 // loop_footer
      %s29 = sadd.s32 1, %s25
    $region7: #{vae_forward.1} parent=1 // loop_footer_branch
      %24 = sbr.rel target = $region3
    $region8: #{vae_forward.1} parent=1 // loop_exit
      _
    %2233 = vsyncpa [#allocation3], 1
    %s2234 = scalar_lea.sflag [#allocation3], 1
    %2235 = vsyncpa %s2234, 1
    %2236 = vsyncpa [#allocation5], 1
    %s2237 = scalar_lea.sflag [#allocation5], 1
    %2238 = vsyncpa %s2237, 1

</llo_original>
